<compile_context>
chip_gen: v6e
topology: v6e:2x2x1
jax: 0.10.0
libtpu: 0.0.40
codegen_flags: <defaults>
</compile_context>

<pallas_src>
import math
from functools import partial

import jax
import jax.numpy as jnp
from jax import lax
from jax.experimental import pallas as pl
from jax.experimental.pallas import tpu as pltpu

# ----- model hyper-parameters (small, consistent with the module) -----
FOURIER_ORDER = 4
HIDDEN = 32                       # hidden_size   (small-shape demo)
NUM_HIDDEN = 3                    # num_hidden_layers
FEAT = FOURIER_ORDER * 4 + 2      # = 18, SkipConn init_size
DIN = 2 * HIDDEN + FEAT           # = 82, width of [cur | prev | x]
LEAKY_SLOPE = 0.01
BN_EPS = 1e-5


def fourier_skipconn_kernel(xt_ref, w_ref, b_ref, wo_ref, bo_ref, o_ref,
                            slab_ref):
    """Whole Fourier + SkipConn forward for one batch tile (transposed layout).

    xt_ref : (2, bt)            raw coordinates, transposed (batch on lanes)
    w_ref  : (L+1, H, K)        stacked transposed weights, BN-folded, K-padded,
                                slot-permuted per layer parity.
    b_ref  : (L+1, H, 1)        BN-folded biases.
    wo_ref : (8, K)             outLayer weight in row 0 (rows 1..7 zero).
    bo_ref : (1, 1)             outLayer bias.
    o_ref  : (1, bt)            lane-dense output row.
    slab_ref: (K, bt) VMEM      persistent combined slab [cur|prev|feats|pad].
    """
    l_plus_1, H, kdim = w_ref.shape
    bt = xt_ref.shape[1]
    order = FOURIER_ORDER
    feat_rows = 4 * order + 2

    # ---- Fourier features (features along sublanes, batch along lanes) ------
    xt = xt_ref[...]                                               # (2, bt)
    orders = (lax.broadcasted_iota(jnp.int32, (order, 1), 0)
              .astype(jnp.float32) + 1.0)                          # (order, 1)
    ang = jnp.concatenate([orders * xt[0:1, :],
                           orders * xt[1:2, :]], axis=0)           # (2*order, bt)
    feat = jnp.concatenate([jnp.sin(ang), jnp.cos(ang), xt], axis=0)  # (F, bt)

    # ---- combined slab: [slotA | slotB | feats | zero-pad] -------------------
    slab_ref[...] = jnp.concatenate(
        [jnp.zeros((2 * H, bt), jnp.float32),
         feat,
         jnp.zeros((kdim - 2 * H - feat_rows, bt), jnp.float32)], axis=0)

    def leaky(z):
        return jnp.where(z > 0, z, LEAKY_SLOPE * z)

    # ---- L+1 identical (H, K) x (K, bt) MXU dots; write slot alternates ------
    # Layer 0 = inLayer (weights only in feats rows); layers 1..L = hidden.
    for i in range(l_plus_1):                       # static unroll
        z = jnp.dot(w_ref[i], slab_ref[...],
                    preferred_element_type=jnp.float32) + b_ref[i]   # (H, bt)
        slot = i % 2
        slab_ref[slot * H:(slot + 1) * H, :] = leaky(z)

    # ---- outLayer + (tanh(y)+1)/2, lane-dense store ---------------------------
    y = jnp.dot(wo_ref[...], slab_ref[...],
                preferred_element_type=jnp.float32)[0:1, :]           # (1, bt)
    o_ref[...] = (jnp.tanh(y + bo_ref[...]) + 1.0) * 0.5


def init_params(key, hidden=HIDDEN, num_hidden=NUM_HIDDEN,
                fourier_order=FOURIER_ORDER):
    """PyTorch-style uniform(+-1/sqrt(fan_in)) init.

    Returns (packed, raw):
      packed : kernel-layout params (BN folded, K padded, parity-permuted).
      raw    : torch-layout params for the pure-JAX reference.
    """
    H, L, O = hidden, num_hidden, fourier_order
    F = 4 * O + 2
    din = 2 * H + F
    K = -(-din // 128) * 128                      # pad contraction dim to 128
    assert H % 8 == 0

    keys = jax.random.split(key, 2 * (L + 2))

    def lin(k, fan_in, shape):
        bound = 1.0 / math.sqrt(fan_in)
        return jax.random.uniform(k, shape, jnp.float32, -bound, bound)

    # ---- raw (torch-semantics) params, stored (in_features, out_features) ----
    raw = {
        "w_in": lin(keys[0], F, (F, H)),
        "b_in": lin(keys[1], F, (H,)),
        "w_h": [], "b_h": [],
    }
    for i in range(L):
        fan_in = H + F if i == 0 else din
        raw["w_h"].append(lin(keys[2 + 2 * i], fan_in, (fan_in, H)))
        raw["b_h"].append(lin(keys[3 + 2 * i], fan_in, (H,)))
    raw["w_out"] = lin(keys[2 + 2 * L], din, (din, 1))
    raw["b_out"] = lin(keys[3 + 2 * L], din, (1,))

    # ---- eval-mode BatchNorm fold (defaults gamma=1, beta=0, mean=0, var=1) --
    s = 1.0 / math.sqrt(1.0 + BN_EPS)
    t = 0.0

    # ---- feats permutation: kernel feat order -> torch feat order ------------
    # kernel order: [sin(x0)*O, sin(x1)*O, cos(x0)*O, cos(x1)*O, x0, x1]
    # torch  order: [sin(x0)*O, cos(x0)*O, x0, sin(x1)*O, cos(x1)*O, x1]
    perm = (list(range(O)) + list(range(2 * O + 1, 3 * O + 1))
            + list(range(O, 2 * O)) + list(range(3 * O + 1, 4 * O + 1))
            + [2 * O, 4 * O + 1])
    perm = jnp.array(perm, dtype=jnp.int32)

    def pack_k(cur_w, prev_w, x_w, cur_slot, prev_slot):
        """Build a (K, n) slab-ordered weight from torch-ordered pieces."""
        n = x_w.shape[1]
        wk = jnp.zeros((K, n), jnp.float32)
        if cur_w is not None:
            wk = wk.at[cur_slot * H:(cur_slot + 1) * H, :].set(cur_w)
        if prev_w is not None:
            wk = wk.at[prev_slot * H:(prev_slot + 1) * H, :].set(prev_w)
        wk = wk.at[2 * H:2 * H + F, :].set(x_w[perm, :])
        return wk

    w_stack, b_stack = [], []
    # layer 0 = inLayer (only feats rows non-zero)
    w_stack.append(pack_k(None, None, raw["w_in"] * s, 0, 1).T)     # (H, K)
    b_stack.append((raw["b_in"] * s + t)[:, None])                  # (H, 1)
    # hidden layers
    for i in range(L):
        li = i + 1
        cur_slot, prev_slot = (li - 1) % 2, li % 2
        w = raw["w_h"][i] * s
        b = raw["b_h"][i] * s + t
        if i == 0:   # in_size = H + F (no prev slab)
            wk = pack_k(w[:H], None, w[H:], cur_slot, prev_slot)
        else:        # in_size = 2H + F
            wk = pack_k(w[:H], w[H:2 * H], w[2 * H:], cur_slot, prev_slot)
        w_stack.append(wk.T)
        b_stack.append(b[:, None])
    # output layer (no BN)
    cur_slot, prev_slot = L % 2, (L + 1) % 2
    wo_k = pack_k(raw["w_out"][:H], raw["w_out"][H:2 * H], raw["w_out"][2 * H:],
                  cur_slot, prev_slot)                              # (K, 1)
    wo_pad = jnp.zeros((8, K), jnp.float32).at[0, :].set(wo_k[:, 0])

    packed = dict(
        w=jnp.stack(w_stack),                 # (L+1, H, K)
        b=jnp.stack(b_stack),                 # (L+1, H, 1)
        w_out=wo_pad,                         # (8, K)
        b_out=raw["b_out"].reshape(1, 1),     # (1, 1)
    )
    return packed, raw


@partial(jax.jit, static_argnames=("batch_tile",))
def fourier_forward(x, params, batch_tile=None):
    """x: (B, 2) -> (B, 1) in [0, 1]."""
    B = x.shape[0]
    if batch_tile is None:
        bt = B
        for cand in (2048, 1024, 512, 256):
            if B > cand and B % cand == 0:
                bt = cand
                break
    else:
        bt = batch_tile
    assert B % bt == 0, "batch must be divisible by batch_tile"
    if bt != B:
        assert bt % 128 == 0, "tiled batch blocks must be lane-dense (x128)"

    w, b, wo, bo = params["w"], params["b"], params["w_out"], params["b_out"]
    kpad = w.shape[2]
    grid = (B // bt,)
    x_t = x.T                                  # (2, B): batch on the lane axis

    out_row = pl.pallas_call(
        fourier_skipconn_kernel,
        out_shape=jax.ShapeDtypeStruct((1, B), jnp.float32),
        grid_spec=pltpu.PrefetchScalarGridSpec(
            num_scalar_prefetch=0,
            grid=grid,
            in_specs=[
                pl.BlockSpec((2, bt), lambda i: (0, i)),         # x (transposed)
                pl.BlockSpec(w.shape, lambda i: (0, 0, 0)),      # stacked weights
                pl.BlockSpec(b.shape, lambda i: (0, 0, 0)),      # stacked biases
                pl.BlockSpec(wo.shape, lambda i: (0, 0)),        # out weight
                pl.BlockSpec(bo.shape, lambda i: (0, 0)),        # out bias
            ],
            out_specs=pl.BlockSpec((1, bt), lambda i: (0, i)),
            scratch_shapes=[pltpu.VMEM((kpad, bt), jnp.float32)],
        ),
        compiler_params=pltpu.CompilerParams(
            dimension_semantics=("parallel",)),
    )(x_t, w, b, wo, bo)

    return out_row.reshape(B, 1)


def fourier_forward_ref(x, raw, num_hidden=NUM_HIDDEN,
                        fourier_order=FOURIER_ORDER):
    """Pure-JAX mirror of the PyTorch module (eval mode) on RAW parameters."""
    O = fourier_order
    orders = jnp.arange(1, O + 1, dtype=jnp.float32)
    xe = x[..., None]                                              # (B, 2, 1)
    feats = jnp.concatenate(
        [jnp.sin(orders * xe), jnp.cos(orders * xe), xe], axis=-1)
    feats = feats.reshape(x.shape[0], -1)                          # torch order

    bn = lambda z: z / jnp.sqrt(1.0 + BN_EPS)   # eval BN, default running stats
    leaky = lambda z: jnp.where(z > 0, z, LEAKY_SLOPE * z)

    cur = leaky(bn(feats @ raw["w_in"] + raw["b_in"]))   # Dropout=identity (eval)
    prev = jnp.zeros((x.shape[0], 0), jnp.float32)
    for i in range(num_hidden):
        combined = jnp.concatenate([cur, prev, feats], axis=1)
        prev, cur = cur, leaky(bn(combined @ raw["w_h"][i] + raw["b_h"][i]))
    combined = jnp.concatenate([cur, prev, feats], axis=1)
    y = combined @ raw["w_out"] + raw["b_out"]
    return (jnp.tanh(y) + 1.0) * 0.5


if __name__ == "__main__":
    key = jax.random.PRNGKey(0)
    kx, kp = jax.random.split(key)

    B = 512
    x = jax.random.normal(kx, (B, 2), jnp.float32)     # Fourier takes (B, 2)
    params, raw = init_params(kp)
    ref = fourier_forward_ref(x, raw)

    # tiled path: grid=(2,), 256-wide lane-dense blocks, parallel grid axis
    out = fourier_forward(x, params, batch_tile=256)
    jax.block_until_ready(out)
    assert out.shape == (B, 1)
    assert bool(jnp.all((out >= 0.0) & (out <= 1.0)))
    assert bool(jnp.allclose(out, ref, atol=5e-3, rtol=1e-3)), "tiled mismatch"

    # single-tile path: grid=(1,), whole batch in one block
    out_full = fourier_forward(x, params, batch_tile=B)
    jax.block_until_ready(out_full)
    assert bool(jnp.allclose(out_full, ref, atol=5e-3, rtol=1e-3)), \
        "full-tile mismatch"

    print("KERNEL_OK")
</pallas_src>

<mosaic_0001>
module attributes {stable_mosaic.version = 11 : i64} {
  func.func @fourier_skipconn_kernel(%arg0: i32, %arg1: memref<2x256xf32, #tpu.memory_space<vmem>>, %arg2: memref<4x32x128xf32, #tpu.memory_space<vmem>>, %arg3: memref<4x32x1xf32, #tpu.memory_space<vmem>>, %arg4: memref<8x128xf32, #tpu.memory_space<vmem>>, %arg5: memref<1x1xf32, #tpu.memory_space<vmem>>, %arg6: memref<1x256xf32, #tpu.memory_space<vmem>>, %arg7: memref<128x256xf32, #tpu.memory_space<vmem>>) attributes {dimension_semantics = [#tpu.dimension_semantics<parallel>], iteration_bounds = array<i64: 2>, scalar_prefetch = 0 : i64, scratch_operands = 1 : i64, tpu.core_type = #tpu.core_type<tc>, window_params = [{transform_indices = @transform_0, window_bounds = array<i64: 2, 256>}, {pipeline_mode = #tpu.pipeline_mode<synchronous>, transform_indices = @transform_1, window_bounds = array<i64: 4, 32, 128>}, {pipeline_mode = #tpu.pipeline_mode<synchronous>, transform_indices = @transform_2, window_bounds = array<i64: 4, 32, 1>}, {pipeline_mode = #tpu.pipeline_mode<synchronous>, transform_indices = @transform_3, window_bounds = array<i64: 8, 128>}, {pipeline_mode = #tpu.pipeline_mode<synchronous>, transform_indices = @transform_4, window_bounds = array<i64: 1, 1>}, {transform_indices = @transform_5, window_bounds = array<i64: 1, 256>}]} {
    %c0 = arith.constant 0 : index
    %c0_0 = arith.constant 0 : index
    %0 = vector.load %arg1[%c0, %c0_0] : memref<2x256xf32, #tpu.memory_space<vmem>>, vector<2x256xf32>
    %1 = tpu.iota {dimensions = array<i32: 0>} : vector<4x1xi32>
    %2 = arith.sitofp %1 : vector<4x1xi32> to vector<4x1xf32>
    %cst = arith.constant 1.000000e+00 : f32
    %3 = vector.broadcast %cst : f32 to vector<4x1xf32>
    %4 = arith.addf %2, %3 : vector<4x1xf32>
    %5 = vector.extract_strided_slice %0 {offsets = [0, 0], sizes = [1, 256], strides = [1, 1]} : vector<2x256xf32> to vector<1x256xf32>
    %6 = vector.broadcast %4 : vector<4x1xf32> to vector<4x256xf32>
    %7 = vector.broadcast %5 : vector<1x256xf32> to vector<4x256xf32>
    %8 = arith.mulf %6, %7 : vector<4x256xf32>
    %9 = vector.extract_strided_slice %0 {offsets = [1, 0], sizes = [1, 256], strides = [1, 1]} : vector<2x256xf32> to vector<1x256xf32>
    %10 = vector.broadcast %4 : vector<4x1xf32> to vector<4x256xf32>
    %11 = vector.broadcast %9 : vector<1x256xf32> to vector<4x256xf32>
    %12 = arith.mulf %10, %11 : vector<4x256xf32>
    %13 = tpu.concatenate %8, %12 in 0 : vector<4x256xf32>, vector<4x256xf32> -> vector<8x256xf32>
    %14 = math.sin %13 : vector<8x256xf32>
    %15 = math.cos %13 : vector<8x256xf32>
    %16 = tpu.concatenate %14, %15, %0 in 0 : vector<8x256xf32>, vector<8x256xf32>, vector<2x256xf32> -> vector<18x256xf32>
    %cst_1 = arith.constant 0.000000e+00 : f32
    %17 = vector.broadcast %cst_1 : f32 to vector<64x256xf32>
    %cst_2 = arith.constant 0.000000e+00 : f32
    %18 = vector.broadcast %cst_2 : f32 to vector<46x256xf32>
    %19 = tpu.concatenate %17, %16, %18 in 0 : vector<64x256xf32>, vector<18x256xf32>, vector<46x256xf32> -> vector<128x256xf32>
    %c0_3 = arith.constant 0 : index
    %c0_4 = arith.constant 0 : index
    %20 = vector.load %arg7[%c0_3, %c0_4] : memref<128x256xf32, #tpu.memory_space<vmem>>, vector<128x256xf32>
    tpu.vector_store %arg7[%c0_3, %c0_4], %19 {strides = array<i32>} : memref<128x256xf32, #tpu.memory_space<vmem>>, vector<128x256xf32>,
    %c0_5 = arith.constant 0 : index
    %c0_6 = arith.constant 0 : index
    %c0_7 = arith.constant 0 : index
    %21 = vector.load %arg2[%c0_5, %c0_6, %c0_7] : memref<4x32x128xf32, #tpu.memory_space<vmem>>, vector<1x32x128xf32>
    %22 = vector.shape_cast %21 : vector<1x32x128xf32> to vector<32x128xf32>
    %c0_8 = arith.constant 0 : index
    %c0_9 = arith.constant 0 : index
    %23 = vector.load %arg7[%c0_8, %c0_9] : memref<128x256xf32, #tpu.memory_space<vmem>>, vector<128x256xf32>
    %cst_10 = arith.constant dense<0.000000e+00> : vector<32x256xf32>
    %24 = tpu.matmul %22, %23, %cst_10 {dimension_numbers = #tpu.dot_dimension_numbers<[1], [0], [0], [1], [0, 0, 1, 1], [], []>} : vector<32x128xf32>, vector<128x256xf32>, vector<32x256xf32> -> vector<32x256xf32>
    %c0_11 = arith.constant 0 : index
    %c0_12 = arith.constant 0 : index
    %c0_13 = arith.constant 0 : index
    %25 = vector.load %arg3[%c0_11, %c0_12, %c0_13] : memref<4x32x1xf32, #tpu.memory_space<vmem>>, vector<1x32x1xf32>
    %26 = vector.shape_cast %25 : vector<1x32x1xf32> to vector<32x1xf32>
    %27 = vector.broadcast %26 : vector<32x1xf32> to vector<32x256xf32>
    %28 = arith.addf %24, %27 : vector<32x256xf32>
    %cst_14 = arith.constant 0.000000e+00 : f32
    %29 = vector.broadcast %cst_14 : f32 to vector<32x256xf32>
    %30 = arith.cmpf ogt, %28, %29 : vector<32x256xf32>
    %cst_15 = arith.constant 0.00999999977 : f32
    %31 = vector.broadcast %cst_15 : f32 to vector<32x256xf32>
    %32 = arith.mulf %31, %28 : vector<32x256xf32>
    %33 = arith.select %30, %28, %32 : vector<32x256xi1>, vector<32x256xf32>
    %c0_16 = arith.constant 0 : index
    %c0_17 = arith.constant 0 : index
    %34 = vector.load %arg7[%c0_16, %c0_17] : memref<128x256xf32, #tpu.memory_space<vmem>>, vector<32x256xf32>
    tpu.vector_store %arg7[%c0_16, %c0_17], %33 {strides = array<i32>} : memref<128x256xf32, #tpu.memory_space<vmem>>, vector<32x256xf32>,
    %c1 = arith.constant 1 : index
    %c0_18 = arith.constant 0 : index
    %c0_19 = arith.constant 0 : index
    %35 = vector.load %arg2[%c1, %c0_18, %c0_19] : memref<4x32x128xf32, #tpu.memory_space<vmem>>, vector<1x32x128xf32>
    %36 = vector.shape_cast %35 : vector<1x32x128xf32> to vector<32x128xf32>
    %c0_20 = arith.constant 0 : index
    %c0_21 = arith.constant 0 : index
    %37 = vector.load %arg7[%c0_20, %c0_21] : memref<128x256xf32, #tpu.memory_space<vmem>>, vector<128x256xf32>
    %cst_22 = arith.constant dense<0.000000e+00> : vector<32x256xf32>
    %38 = tpu.matmul %36, %37, %cst_22 {dimension_numbers = #tpu.dot_dimension_numbers<[1], [0], [0], [1], [0, 0, 1, 1], [], []>} : vector<32x128xf32>, vector<128x256xf32>, vector<32x256xf32> -> vector<32x256xf32>
    %c1_23 = arith.constant 1 : index
    %c0_24 = arith.constant 0 : index
    %c0_25 = arith.constant 0 : index
    %39 = vector.load %arg3[%c1_23, %c0_24, %c0_25] : memref<4x32x1xf32, #tpu.memory_space<vmem>>, vector<1x32x1xf32>
    %40 = vector.shape_cast %39 : vector<1x32x1xf32> to vector<32x1xf32>
    %41 = vector.broadcast %40 : vector<32x1xf32> to vector<32x256xf32>
    %42 = arith.addf %38, %41 : vector<32x256xf32>
    %cst_26 = arith.constant 0.000000e+00 : f32
    %43 = vector.broadcast %cst_26 : f32 to vector<32x256xf32>
    %44 = arith.cmpf ogt, %42, %43 : vector<32x256xf32>
    %cst_27 = arith.constant 0.00999999977 : f32
    %45 = vector.broadcast %cst_27 : f32 to vector<32x256xf32>
    %46 = arith.mulf %45, %42 : vector<32x256xf32>
    %47 = arith.select %44, %42, %46 : vector<32x256xi1>, vector<32x256xf32>
    %c32 = arith.constant 32 : index
    %c0_28 = arith.constant 0 : index
    %48 = vector.load %arg7[%c32, %c0_28] : memref<128x256xf32, #tpu.memory_space<vmem>>, vector<32x256xf32>
    tpu.vector_store %arg7[%c32, %c0_28], %47 {strides = array<i32>} : memref<128x256xf32, #tpu.memory_space<vmem>>, vector<32x256xf32>,
    %c2 = arith.constant 2 : index
    %c0_29 = arith.constant 0 : index
    %c0_30 = arith.constant 0 : index
    %49 = vector.load %arg2[%c2, %c0_29, %c0_30] : memref<4x32x128xf32, #tpu.memory_space<vmem>>, vector<1x32x128xf32>
    %50 = vector.shape_cast %49 : vector<1x32x128xf32> to vector<32x128xf32>
    %c0_31 = arith.constant 0 : index
    %c0_32 = arith.constant 0 : index
    %51 = vector.load %arg7[%c0_31, %c0_32] : memref<128x256xf32, #tpu.memory_space<vmem>>, vector<128x256xf32>
    %cst_33 = arith.constant dense<0.000000e+00> : vector<32x256xf32>
    %52 = tpu.matmul %50, %51, %cst_33 {dimension_numbers = #tpu.dot_dimension_numbers<[1], [0], [0], [1], [0, 0, 1, 1], [], []>} : vector<32x128xf32>, vector<128x256xf32>, vector<32x256xf32> -> vector<32x256xf32>
    %c2_34 = arith.constant 2 : index
    %c0_35 = arith.constant 0 : index
    %c0_36 = arith.constant 0 : index
    %53 = vector.load %arg3[%c2_34, %c0_35, %c0_36] : memref<4x32x1xf32, #tpu.memory_space<vmem>>, vector<1x32x1xf32>
    %54 = vector.shape_cast %53 : vector<1x32x1xf32> to vector<32x1xf32>
    %55 = vector.broadcast %54 : vector<32x1xf32> to vector<32x256xf32>
    %56 = arith.addf %52, %55 : vector<32x256xf32>
    %cst_37 = arith.constant 0.000000e+00 : f32
    %57 = vector.broadcast %cst_37 : f32 to vector<32x256xf32>
    %58 = arith.cmpf ogt, %56, %57 : vector<32x256xf32>
    %cst_38 = arith.constant 0.00999999977 : f32
    %59 = vector.broadcast %cst_38 : f32 to vector<32x256xf32>
    %60 = arith.mulf %59, %56 : vector<32x256xf32>
    %61 = arith.select %58, %56, %60 : vector<32x256xi1>, vector<32x256xf32>
    %c0_39 = arith.constant 0 : index
    %c0_40 = arith.constant 0 : index
    %62 = vector.load %arg7[%c0_39, %c0_40] : memref<128x256xf32, #tpu.memory_space<vmem>>, vector<32x256xf32>
    tpu.vector_store %arg7[%c0_39, %c0_40], %61 {strides = array<i32>} : memref<128x256xf32, #tpu.memory_space<vmem>>, vector<32x256xf32>,
    %c3 = arith.constant 3 : index
    %c0_41 = arith.constant 0 : index
    %c0_42 = arith.constant 0 : index
    %63 = vector.load %arg2[%c3, %c0_41, %c0_42] : memref<4x32x128xf32, #tpu.memory_space<vmem>>, vector<1x32x128xf32>
    %64 = vector.shape_cast %63 : vector<1x32x128xf32> to vector<32x128xf32>
    %c0_43 = arith.constant 0 : index
    %c0_44 = arith.constant 0 : index
    %65 = vector.load %arg7[%c0_43, %c0_44] : memref<128x256xf32, #tpu.memory_space<vmem>>, vector<128x256xf32>
    %cst_45 = arith.constant dense<0.000000e+00> : vector<32x256xf32>
    %66 = tpu.matmul %64, %65, %cst_45 {dimension_numbers = #tpu.dot_dimension_numbers<[1], [0], [0], [1], [0, 0, 1, 1], [], []>} : vector<32x128xf32>, vector<128x256xf32>, vector<32x256xf32> -> vector<32x256xf32>
    %c3_46 = arith.constant 3 : index
    %c0_47 = arith.constant 0 : index
    %c0_48 = arith.constant 0 : index
    %67 = vector.load %arg3[%c3_46, %c0_47, %c0_48] : memref<4x32x1xf32, #tpu.memory_space<vmem>>, vector<1x32x1xf32>
    %68 = vector.shape_cast %67 : vector<1x32x1xf32> to vector<32x1xf32>
    %69 = vector.broadcast %68 : vector<32x1xf32> to vector<32x256xf32>
    %70 = arith.addf %66, %69 : vector<32x256xf32>
    %cst_49 = arith.constant 0.000000e+00 : f32
    %71 = vector.broadcast %cst_49 : f32 to vector<32x256xf32>
    %72 = arith.cmpf ogt, %70, %71 : vector<32x256xf32>
    %cst_50 = arith.constant 0.00999999977 : f32
    %73 = vector.broadcast %cst_50 : f32 to vector<32x256xf32>
    %74 = arith.mulf %73, %70 : vector<32x256xf32>
    %75 = arith.select %72, %70, %74 : vector<32x256xi1>, vector<32x256xf32>
    %c32_51 = arith.constant 32 : index
    %c0_52 = arith.constant 0 : index
    %76 = vector.load %arg7[%c32_51, %c0_52] : memref<128x256xf32, #tpu.memory_space<vmem>>, vector<32x256xf32>
    tpu.vector_store %arg7[%c32_51, %c0_52], %75 {strides = array<i32>} : memref<128x256xf32, #tpu.memory_space<vmem>>, vector<32x256xf32>,
    %c0_53 = arith.constant 0 : index
    %c0_54 = arith.constant 0 : index
    %77 = vector.load %arg4[%c0_53, %c0_54] : memref<8x128xf32, #tpu.memory_space<vmem>>, vector<8x128xf32>
    %c0_55 = arith.constant 0 : index
    %c0_56 = arith.constant 0 : index
    %78 = vector.load %arg7[%c0_55, %c0_56] : memref<128x256xf32, #tpu.memory_space<vmem>>, vector<128x256xf32>
    %cst_57 = arith.constant dense<0.000000e+00> : vector<8x256xf32>
    %79 = tpu.matmul %77, %78, %cst_57 {dimension_numbers = #tpu.dot_dimension_numbers<[1], [0], [0], [1], [0, 0, 1, 1], [], []>} : vector<8x128xf32>, vector<128x256xf32>, vector<8x256xf32> -> vector<8x256xf32>
    %80 = vector.extract_strided_slice %79 {offsets = [0, 0], sizes = [1, 256], strides = [1, 1]} : vector<8x256xf32> to vector<1x256xf32>
    %c0_58 = arith.constant 0 : index
    %c0_59 = arith.constant 0 : index
    %81 = vector.load %arg5[%c0_58, %c0_59] : memref<1x1xf32, #tpu.memory_space<vmem>>, vector<1x1xf32>
    %82 = vector.broadcast %81 : vector<1x1xf32> to vector<1x256xf32>
    %83 = arith.addf %80, %82 : vector<1x256xf32>
    %84 = math.tanh %83 : vector<1x256xf32>
    %cst_60 = arith.constant 1.000000e+00 : f32
    %85 = vector.broadcast %cst_60 : f32 to vector<1x256xf32>
    %86 = arith.addf %84, %85 : vector<1x256xf32>
    %cst_61 = arith.constant 5.000000e-01 : f32
    %87 = vector.broadcast %cst_61 : f32 to vector<1x256xf32>
    %88 = arith.mulf %86, %87 : vector<1x256xf32>
    %c0_62 = arith.constant 0 : index
    %c0_63 = arith.constant 0 : index
    %89 = vector.load %arg6[%c0_62, %c0_63] : memref<1x256xf32, #tpu.memory_space<vmem>>, vector<1x256xf32>
    tpu.vector_store %arg6[%c0_62, %c0_63], %88 {strides = array<i32>} : memref<1x256xf32, #tpu.memory_space<vmem>>, vector<1x256xf32>,
    return
  }
  func.func @transform_0(%arg0: i32) -> (i32, i32) {
    %c0_i32 = arith.constant 0 : i32
    %c0_i32_0 = arith.constant 0 : i32
    return %c0_i32, %arg0 : i32, i32
  }
  func.func @transform_1(%arg0: i32) -> (i32, i32, i32) {
    %c0_i32 = arith.constant 0 : i32
    %c0_i32_0 = arith.constant 0 : i32
    %c0_i32_1 = arith.constant 0 : i32
    %c0_i32_2 = arith.constant 0 : i32
    return %c0_i32, %c0_i32_0, %c0_i32_1 : i32, i32, i32
  }
  func.func @transform_2(%arg0: i32) -> (i32, i32, i32) {
    %c0_i32 = arith.constant 0 : i32
    %c0_i32_0 = arith.constant 0 : i32
    %c0_i32_1 = arith.constant 0 : i32
    %c0_i32_2 = arith.constant 0 : i32
    return %c0_i32, %c0_i32_0, %c0_i32_1 : i32, i32, i32
  }
  func.func @transform_3(%arg0: i32) -> (i32, i32) {
    %c0_i32 = arith.constant 0 : i32
    %c0_i32_0 = arith.constant 0 : i32
    %c0_i32_1 = arith.constant 0 : i32
    return %c0_i32, %c0_i32_0 : i32, i32
  }
  func.func @transform_4(%arg0: i32) -> (i32, i32) {
    %c0_i32 = arith.constant 0 : i32
    %c0_i32_0 = arith.constant 0 : i32
    %c0_i32_1 = arith.constant 0 : i32
    return %c0_i32, %c0_i32_0 : i32, i32
  }
  func.func @transform_5(%arg0: i32) -> (i32, i32) {
    %c0_i32 = arith.constant 0 : i32
    %c0_i32_0 = arith.constant 0 : i32
    return %c0_i32, %arg0 : i32, i32
  }
}

</mosaic_0001>

<llo_original>
// kernel: fourier_forward.1
$region0: #{fourier_forward.1}
  #allocation0 [shape = 'u32[]', space=smem, size = 0x4, offset = 0x4, fixed_abs, tag = 'smem constant byte address 0x4 - core index']
  #allocation1 [shape = 'u32[144,128]{1,0:T(1,128)}', space=vmem, size = 0x12000, scoped, tag = 'internal scratch']
  #allocation2 [shape = 'f32[128,256]{1,0:T(8,128)}', space=vmem, size = 0x20000, scoped, tag = 'scratch operand']
  #allocation3 [shape = 'f32[1,1]{1,0:T(1,128)S(1)}', space=vmem, size = 0x200, scoped, tag = 'scoped memory for fourier_forward.1']
  %s0 = inlined_call_operand.vmem [shape: f32[2,512], index: 0, kind: input, shape index: {}]
  %s1 = inlined_call_operand.vmem [shape: f32[4,32,128], index: 1, kind: input, shape index: {}]
  %s2 = inlined_call_operand.vmem [shape: f32[4,32,1], index: 2, kind: input, shape index: {}]
  %s3 = inlined_call_operand.hbm [shape: f32[8,128], index: 3, kind: input, shape index: {}]
  %s4 = inlined_call_operand.<no memory space> [shape: f32[1,1], index: 4, kind: input, shape index: {}]
  %s5 = inlined_call_operand.hbm [shape: f32[1,512], index: 5, kind: output, shape index: {}]
  %s6 = sld [smem:[#allocation0]]
  $region57: #{fourier_forward.1} parent=0
    _
  %s8 = ssub.s32 1, %s6
  %s9 = scalar_select 0, %s8, %s6
  %v10 = vstv %s4
  %11 = vst [vmem:[#allocation3] sm:$0x1] %v10
  $region1: #{fourier_forward.1} parent=0
    #allocation4 [shape = 'u8[4096]{0}', space=vmem, size = 0x1000, scoped, tag = 'input window, operand 3, single buffered']
    #allocation5 [shape = 's32[2]{0}', space=sflag, size = 0x8, scoped, tag = 'scoped memory for fourier_forward.1']
    #allocation6 [shape = 's32[2]{0}', space=sflag, size = 0x8, scoped, tag = 'scoped memory for fourier_forward.1']
    #allocation7 [shape = 'u8[2048]{0}', space=vmem, size = 0x800, scoped, tag = 'output window, operand 0']
    %12 = vsyncpa [#allocation5], 0
    %13 = vsyncpa [#allocation6], 0
    %s14 = scalar_lea.sflag [#allocation6], 1
    %15 = vsyncpa %s14, 0
    loop: start=0, step=1, limit=4
    $region2: #{fourier_forward.1} parent=1 // loop_pre_header
      _
    $region3: #{fourier_forward.1} parent=1 // loop_header
      %s17 = sphi 0, %s21
      %p18 = scmp.ge.s32.totalorder %s17, 4
      %s27 = sphi 0, %s29
      %s30 = sphi 0, %s27
      %s31 = sphi 0, %s30
      %s47 = sphi 0, %s31
      %s51 = sphi 0, %s51
      %s53 = sphi 0, %s51
      %s54 = sphi 0, %s53
      %s68 = sphi 0, %s54
      %s72 = sphi 0, %s72
      %s74 = sphi 0, %s72
      %s75 = sphi 0, %s74
      %s89 = sphi 0, %s75
      %s93 = sphi 0, %s93
      %s95 = sphi 0, %s93
      %s96 = sphi 0, %s95
      %s110 = sphi 0, %s96
      %s114 = sphi 0, %s114
      %s116 = sphi 0, %s114
      %s117 = sphi 0, %s116
      %s131 = sphi 0, %s117
      %s137 = sphi 0, %s139
      %s140 = sphi 0, %s137
      %s141 = sphi 0, %s140
      %s157 = sphi 0, %s141
    $region4: #{fourier_forward.1} parent=1 // loop_header_branch
      %20 = sbr.rel (%p18) target = $region8
    $region5: #{fourier_forward.1} parent=1 // loop_body
      %s22 = ssub.s32 %s17, 1
      %s23 = ssub.s32 %s17, 2
      %s24 = sadd.s32 %s17, 1
      %s25 = ssub.s32 %s17, %s24
      %p26 = scmp.eq.s32.totalorder %s25, 0
      %s28 = sadd.s32 %s27, 1
      %s29 = scalar_select %p26, %s27, %s28
      %p32 = pneg %p26
      %p33 = scmp.eq.s32.totalorder %s17, 1
      %p34 = por %p32, %p33
      %p35 = scmp.ne.s32.totalorder %s27, %s30
      %p36 = scmp.eq.s32.totalorder %s17, 0
      %p37 = por %p35, %p36
      %p38 = scmp.ne.s32.totalorder %s27, %s30
      %p39 = scmp.eq.s32.totalorder %s22, 1
      %p40 = por %p38, %p39
      %p41 = scmp.ne.s32.totalorder %s30, %s31
      %p42 = scmp.eq.s32.totalorder %s22, 0
      %p43 = por %p41, %p42
      %p44 = scmp.ne.s32.totalorder %s30, %s31
      %p45 = scmp.eq.s32.totalorder %s23, 1
      %p46 = por %p44, %p45
      %p48 = scmp.ne.s32.totalorder %s31, %s47
      %p49 = scmp.eq.s32.totalorder %s23, 0
      %p50 = por %p48, %p49
      %s52 = sadd.s32 %s51, 1
      %p55 = scmp.eq.s32.totalorder %s17, 1
      %p56 = scmp.ne.s32.totalorder %s51, %s53
      %p57 = scmp.eq.s32.totalorder %s17, 0
      %p58 = por %p56, %p57
      %p59 = scmp.ne.s32.totalorder %s51, %s53
      %p60 = scmp.eq.s32.totalorder %s22, 1
      %p61 = por %p59, %p60
      %p62 = scmp.ne.s32.totalorder %s53, %s54
      %p63 = scmp.eq.s32.totalorder %s22, 0
      %p64 = por %p62, %p63
      %p65 = scmp.ne.s32.totalorder %s53, %s54
      %p66 = scmp.eq.s32.totalorder %s23, 1
      %p67 = por %p65, %p66
      %p69 = scmp.ne.s32.totalorder %s54, %s68
      %p70 = scmp.eq.s32.totalorder %s23, 0
      %p71 = por %p69, %p70
      %s73 = sadd.s32 %s72, 1
      %p76 = scmp.eq.s32.totalorder %s17, 1
      %p77 = scmp.ne.s32.totalorder %s72, %s74
      %p78 = scmp.eq.s32.totalorder %s17, 0
      %p79 = por %p77, %p78
      %p80 = scmp.ne.s32.totalorder %s72, %s74
      %p81 = scmp.eq.s32.totalorder %s22, 1
      %p82 = por %p80, %p81
      %p83 = scmp.ne.s32.totalorder %s74, %s75
      %p84 = scmp.eq.s32.totalorder %s22, 0
      %p85 = por %p83, %p84
      %p86 = scmp.ne.s32.totalorder %s74, %s75
      %p87 = scmp.eq.s32.totalorder %s23, 1
      %p88 = por %p86, %p87
      %p90 = scmp.ne.s32.totalorder %s75, %s89
      %p91 = scmp.eq.s32.totalorder %s23, 0
      %p92 = por %p90, %p91
      %s94 = sadd.s32 %s93, 1
      %p97 = scmp.eq.s32.totalorder %s17, 1
      %p98 = scmp.ne.s32.totalorder %s93, %s95
      %p99 = scmp.eq.s32.totalorder %s17, 0
      %p100 = por %p98, %p99
      %p101 = scmp.ne.s32.totalorder %s93, %s95
      %p102 = scmp.eq.s32.totalorder %s22, 1
      %p103 = por %p101, %p102
      %p104 = scmp.ne.s32.totalorder %s95, %s96
      %p105 = scmp.eq.s32.totalorder %s22, 0
      %p106 = por %p104, %p105
      %p107 = scmp.ne.s32.totalorder %s95, %s96
      %p108 = scmp.eq.s32.totalorder %s23, 1
      %p109 = por %p107, %p108
      %p111 = scmp.ne.s32.totalorder %s96, %s110
      %p112 = scmp.eq.s32.totalorder %s23, 0
      %p113 = por %p111, %p112
      %s115 = sadd.s32 %s114, 1
      %p118 = scmp.eq.s32.totalorder %s17, 1
      %p119 = scmp.ne.s32.totalorder %s114, %s116
      %p120 = scmp.eq.s32.totalorder %s17, 0
      %p121 = por %p119, %p120
      %p122 = scmp.ne.s32.totalorder %s114, %s116
      %p123 = scmp.eq.s32.totalorder %s22, 1
      %p124 = por %p122, %p123
      %p125 = scmp.ne.s32.totalorder %s116, %s117
      %p126 = scmp.eq.s32.totalorder %s22, 0
      %p127 = por %p125, %p126
      %p128 = scmp.ne.s32.totalorder %s116, %s117
      %p129 = scmp.eq.s32.totalorder %s23, 1
      %p130 = por %p128, %p129
      %p132 = scmp.ne.s32.totalorder %s117, %s131
      %p133 = scmp.eq.s32.totalorder %s23, 0
      %p134 = por %p132, %p133
      %s135 = ssub.s32 %s17, %s24
      %p136 = scmp.eq.s32.totalorder %s135, 0
      %s138 = sadd.s32 %s137, 1
      %s139 = scalar_select %p136, %s137, %s138
      %p142 = pneg %p136
      %p143 = scmp.eq.s32.totalorder %s17, 1
      %p144 = por %p142, %p143
      %p145 = scmp.ne.s32.totalorder %s137, %s140
      %p146 = scmp.eq.s32.totalorder %s17, 0
      %p147 = por %p145, %p146
      %p148 = scmp.ne.s32.totalorder %s137, %s140
      %p149 = scmp.eq.s32.totalorder %s22, 1
      %p150 = por %p148, %p149
      %p151 = scmp.ne.s32.totalorder %s140, %s141
      %p152 = scmp.eq.s32.totalorder %s22, 0
      %p153 = por %p151, %p152
      %p154 = scmp.ne.s32.totalorder %s140, %s141
      %p155 = scmp.eq.s32.totalorder %s23, 1
      %p156 = por %p154, %p155
      %p158 = scmp.ne.s32.totalorder %s141, %s157
      %p159 = scmp.eq.s32.totalorder %s23, 0
      %p160 = por %p158, %p159
      %p161 = scmp.le.s32.totalorder 1, %s17
      %p162 = scmp.lt.s32.totalorder %s17, 3
      %p163 = pnand %p161, %p162
      %p164 = pneg %p163
      // Predicated region
      $region9: #{fourier_forward.1} parent=5 // pred_check
        _
      $region10: #{fourier_forward.1} parent=5 // pred_check_branch
        %166 = sbr.rel (%p163) target = $region12
      $region11: #{fourier_forward.1} parent=5 // pred_region
        %s167 = ssub.s32 %s17, 1
        // Predicated region
        $region13: #{fourier_forward.1} parent=11 // pred_check
          %p168 = pneg %p64
        $region14: #{fourier_forward.1} parent=11 // pred_check_branch
          %170 = sbr.rel (%p168) target = $region16
        $region15: #{fourier_forward.1} parent=11 // pred_region
          _
        $region16: #{fourier_forward.1} parent=11 // pred_fallthru
          _
        // Predicated region
        $region17: #{fourier_forward.1} parent=11 // pred_check
          %p171 = pneg %p85
        $region18: #{fourier_forward.1} parent=11 // pred_check_branch
          %173 = sbr.rel (%p171) target = $region20
        $region19: #{fourier_forward.1} parent=11 // pred_region
          _
        $region20: #{fourier_forward.1} parent=11 // pred_fallthru
          _
        // Predicated region
        $region21: #{fourier_forward.1} parent=11 // pred_check
          %p174 = pneg %p106
        $region22: #{fourier_forward.1} parent=11 // pred_check_branch
          %176 = sbr.rel (%p174) target = $region24
        $region23: #{fourier_forward.1} parent=11 // pred_region
          %s178 = ssub.s32 128, 128
          %179 = vsyncadd [#allocation5], %s178
          %s181 = sshll.u32 [#allocation4], 4
          %s182 = int_to_ptr.vmem [resolvable:$true] %s181
          %184 = dma.hbm_to_vmem [thread:$0]  %s3, 128, %s182, [#allocation5]
        $region24: #{fourier_forward.1} parent=11 // pred_fallthru
          _
        // Predicated region
        $region25: #{fourier_forward.1} parent=11 // pred_check
          %p185 = pneg %p127
        $region26: #{fourier_forward.1} parent=11 // pred_check_branch
          %187 = sbr.rel (%p185) target = $region28
        $region27: #{fourier_forward.1} parent=11 // pred_region
          _
        $region28: #{fourier_forward.1} parent=11 // pred_fallthru
          _
      $region12: #{fourier_forward.1} parent=5 // pred_fallthru
        _
      %p188 = scmp.lt.s32.totalorder %s17, 2
      // Predicated region
      $region29: #{fourier_forward.1} parent=5 // pred_check
        %p189 = pneg %p188
      $region30: #{fourier_forward.1} parent=5 // pred_check_branch
        %191 = sbr.rel (%p189) target = $region32
      $region31: #{fourier_forward.1} parent=5 // pred_region
        // Predicated region
        $region33: #{fourier_forward.1} parent=31 // pred_check
          %p192 = pneg %p37
        $region34: #{fourier_forward.1} parent=31 // pred_check_branch
          %194 = sbr.rel (%p192) target = $region36
        $region35: #{fourier_forward.1} parent=31 // pred_region
          %s195 = smul.u32 2, %s17
          %p196 = scmp.lt.s32.totalorder %s195, 3
          %s197 = scalar_select %p196, %s195, 3
          %s198 = smul.addr %s197, 2
          %s199 = scalar_lea.vmem %s0, %s198
          %s200 = smul.u32 2, %s17
        $region36: #{fourier_forward.1} parent=31 // pred_fallthru
          _
      $region32: #{fourier_forward.1} parent=5 // pred_fallthru
        _
      %p201 = scmp.le.s32.totalorder 1, %s17
      %p202 = scmp.lt.s32.totalorder %s17, 3
      %p203 = pnand %p201, %p202
      %p204 = pneg %p203
      // Predicated region
      $region37: #{fourier_forward.1} parent=5 // pred_check
        _
      $region38: #{fourier_forward.1} parent=5 // pred_check_branch
        %206 = sbr.rel (%p203) target = $region40
      $region39: #{fourier_forward.1} parent=5 // pred_region
        %s207 = ssub.s32 %s17, 1
        // Predicated region
        $region41: #{fourier_forward.1} parent=39 // pred_check
          %p208 = pneg %p106
        $region42: #{fourier_forward.1} parent=39 // pred_check_branch
          %210 = sbr.rel (%p208) target = $region44
        $region43: #{fourier_forward.1} parent=39 // pred_region
          %211 = dma.done [#allocation5], 128
        $region44: #{fourier_forward.1} parent=39 // pred_fallthru
          _
        %s212 = smul.u32 2, %s22
        %p213 = scmp.lt.s32.totalorder %s212, 3
        %s214 = scalar_select %p213, %s212, 3
        %s215 = smul.addr %s214, 2
        %s216 = scalar_lea.vmem %s0, %s215
        %p217 = pneg %p43
        %p218 = pneg %p40
        %p219 = pneg %p64
        %p220 = pneg %p61
        %p221 = pneg %p85
        %p222 = pneg %p82
        %p223 = pneg %p106
        %p224 = pneg %p103
        %p225 = pneg %p127
        %p226 = pneg %p124
        %p227 = pneg %p153
        %p228 = pneg %p150
        %s229 = sand.u32 %s140, 1
        %s230 = scalar_lea.sflag [#allocation6], %s229
        %s231 = sand.u32 %s140, 1
        %s232 = smul.addr %s231, 2
        %s233 = scalar_lea.vmem [#allocation7], %s232
        %s234 = smul.u32 2, %s22
        %p235 = scmp.lt.s32.totalorder %s234, 3
        %s236 = scalar_select %p235, %s234, 3
        %s237 = smul.addr %s236, 2
        %s238 = scalar_lea.vmem %s0, %s237
        %s239 = smul.u32 2, %s22
        %s240 = smul.u32 2, %s22
        %v241 = vld [vmem:[%s238] sm:$0xf]
        %v242 = vlaneseq
        %v243 = vshrl.u32 %v242, 7
        %v244 = vcvt.s32.f32 %v243
        %v245 = vadd.f32 %v244, 1.0
        %v247 = vlaneseq
        %v248 = vshrl.u32 %v247, 7
        %v249 = vsub.s32 0, %v248
        %v250 = vrot.slane %v241, %v249
        %v251 = vlaneseq
        %v252 = vshrl.u32 %v251, 7
        %v253 = vsub.s32 2, %v252
        %v254 = vrot.slane %v241, %v253
        %v257 = vlaneseq
        %v258 = vshrl.u32 %v257, 7
        %v259 = vsub.s32 0, %v258
        %v260 = vrot.slane %v250, %v259
        %v261 = vlaneseq
        %v262 = vshrl.u32 %v261, 7
        %v263 = vsub.s32 0, %v262
        %v264 = vrot.slane %v254, %v263
        %v265 = vmul.f32 %v245, %v260
        %v266 = vmul.f32 %v245, %v264
        %v267 = vlaneseq
        %v268 = vshrl.u32 %v267, 7
        %v269 = vsub.s32 1, %v268
        %v270 = vrot.slane %v241, %v269
        %v271 = vlaneseq
        %v272 = vshrl.u32 %v271, 7
        %v273 = vsub.s32 3, %v272
        %v274 = vrot.slane %v241, %v273
        %v277 = vlaneseq
        %v278 = vshrl.u32 %v277, 7
        %v279 = vsub.s32 1, %v278
        %v280 = vrot.slane %v270, %v279
        %v281 = vlaneseq
        %v282 = vshrl.u32 %v281, 7
        %v283 = vsub.s32 1, %v282
        %v284 = vrot.slane %v274, %v283
        %v285 = vmul.f32 %v245, %v280
        %v286 = vmul.f32 %v245, %v284
        %v289 = vrot.slane %v285, 4
        %v290 = vrot.slane %v286, 4
        %vm293 = vcmask 1043456
        %v294 = vsel %vm293, %v265, %v289
        %v295 = vsel %vm293, %v266, %v290
        %v296 = vand.u32 2147483647, %v294
        %vm297 = vcmp.le.f32.partialorder %v296, 0.7853982
        %vm298 = vcmp.lt.s32.totalorder %v294, 0
        %v299 = vand.u32 %v294, 2139095040
        %v300 = vshrl.u32 %v299, 23
        %v301 = vsub.s32 %v300, 127
        %v302 = vand.u32 2147483647, %v294
        %v303 = vand.u32 %v302, 8388607
        %v304 = vor.u32 %v303, 8388608
        %v305 = vsub.s32 0, %v304
        %v306 = vadd.s32 %v301, 1
        %vm307 = vcmp.gt.s32.totalorder %v306, 0
        %v308 = vsel %vm307, %v306, 0
        %v309 = vshrl.u32 %v308, 5
        %v310 = vand.u32 %v308, 31
        %v311 = vsub.s32 32, %v310
        %v312 = vshrl.u32 683565275, %v311
        %v313 = vshll.u32 683565275, %v310
        %v314 = vshrl.u32 2475754826, %v311
        %v315 = vor.u32 %v313, %v314
        %v316 = vshll.u32 2475754826, %v310
        %v317 = vshrl.u32 2131351028, %v311
        %v318 = vor.u32 %v316, %v317
        %v319 = vshll.u32 2131351028, %v310
        %v320 = vshrl.u32 2102212464, %v311
        %v321 = vor.u32 %v319, %v320
        %v322 = vshll.u32 2102212464, %v310
        %v323 = vshrl.u32 920167782, %v311
        %v324 = vor.u32 %v322, %v323
        %v325 = vshll.u32 920167782, %v310
        %v326 = vshrl.u32 1326507024, %v311
        %v327 = vor.u32 %v325, %v326
        %vm328 = vcmp.lt.s32.totalorder %v309, 1
        %vm329 = vcmp.lt.s32.totalorder %v309, 2
        %vm330 = vcmp.lt.s32.totalorder %v309, 3
        %vm331 = vcmp.lt.s32.totalorder %v309, 4
        %v332 = vsel %vm328, %v312, %v315
        %v333 = vsel %vm331, %v321, 2102212464
        %v334 = vsel %vm330, %v318, %v333
        %v335 = vsel %vm329, %v332, %v334
        %v336 = vsel %vm328, %v315, %v318
        %v337 = vsel %vm331, %v324, 920167782
        %v338 = vsel %vm330, %v321, %v337
        %v339 = vsel %vm329, %v336, %v338
        %v340 = vsel %vm328, %v318, %v321
        %v341 = vsel %vm331, %v327, 1326507024
        %v342 = vsel %vm330, %v324, %v341
        %v343 = vsel %vm329, %v340, %v342
        %v344 = vshll.u32 %v304, 8
        %v345 = vmul.u32.u64.compose %v344, %v343
        %v346 = vextract.low.u32 %v345
        %v347 = vextract.high.u32 %v345
        %v348 = vmul.u32.u64.compose %v344, %v339
        %v349 = vextract.low.u32 %v348
        %v350 = vextract.high.u32 %v348
        %v351 = vmul.u32 %v344, %v335
        %v352 = vadd.s32 %v347, %v349
        %vm353 = vc.u32 %v347, %v349
        %v354 = vadd.s32 %v350, 1
        %v355 = vsel %vm353, %v354, %v350
        %v356 = vadd.s32 %v351, %v355
        %v357 = vadd.s32 %v356, 536870912
        %v358 = vshrl.u32 %v357, 30
        %v359 = vshll.u32 %v358, 30
        %v360 = vsub.s32 %v356, %v359
        %vm361 = vcmp.lt.s32.totalorder %v360, 0
        %v362 = vsub.s32 0, %v360
        %v363 = vsel %vm361, %v362, %v360
        %v364 = vclz %v363
        %v365 = vsub.s32 %v364, 2
        %vm366 = vcmp.gt.s32.totalorder 0, %v365
        %v367 = vsel %vm366, 0, %v365
        %v368 = vsub.s32 32, %v367
        %v369 = vshll.u32 %v360, %v367
        %v370 = vshrl.u32 %v352, %v368
        %v371 = vor.u32 %v369, %v370
        %v372 = vsub.s32 4294967266, %v367
        %v373 = vadd.s32 %v372, 127
        %v374 = vshll.u32 %v373, 23
        %v375 = vor.u32 4788187, %v374
        %v376 = vand.u32 2147483647, %v375
        %v378 = vcvt.s32.f32 %v371
        %v379 = vmul.f32 %v378, %v376
        %v380 = vxor.u32 %v379, 2147483648
        %v381 = vsel %vm298, %v380, %v379
        %v382 = vsub.s32 4, %v358
        %v383 = vsel %vm298, %v382, %v358
        %v384 = vsel %vm297, %v294, %v381
        %v385 = vsel %vm297, 0, %v383
        %v386 = vcosq.f32.pop %v384
        %v387 = vsinq.f32.pop %v384
        %vm388 = vweird.f32 %v294
        %v389 = vadd.s32 %v385, 3
        %v390 = vand.u32 %v389, 3
        %vm391 = vcmp.lt.s32.totalorder %v390, 2
        %vm392 = vcmp.eq.s32.totalorder %v390, 0
        %v393 = vxor.u32 %v387, 2147483648
        %v394 = vsel %vm392, %v386, %v393
        %vm395 = vcmp.eq.s32.totalorder %v390, 2
        %v396 = vxor.u32 %v386, 2147483648
        %v397 = vsel %vm395, %v396, %v387
        %v398 = vsel %vm391, %v394, %v397
        %v399 = vsel %vm388, nan, %v398
        %v400 = vand.u32 2147483647, %v295
        %vm401 = vcmp.le.f32.partialorder %v400, 0.7853982
        %vm402 = vcmp.lt.s32.totalorder %v295, 0
        %v403 = vand.u32 %v295, 2139095040
        %v404 = vshrl.u32 %v403, 23
        %v405 = vsub.s32 %v404, 127
        %v406 = vand.u32 2147483647, %v295
        %v407 = vand.u32 %v406, 8388607
        %v408 = vor.u32 %v407, 8388608
        %v409 = vsub.s32 0, %v408
        %v410 = vadd.s32 %v405, 1
        %vm411 = vcmp.gt.s32.totalorder %v410, 0
        %v412 = vsel %vm411, %v410, 0
        %v413 = vshrl.u32 %v412, 5
        %v414 = vand.u32 %v412, 31
        %v415 = vsub.s32 32, %v414
        %v416 = vshrl.u32 683565275, %v415
        %v417 = vshll.u32 683565275, %v414
        %v418 = vshrl.u32 2475754826, %v415
        %v419 = vor.u32 %v417, %v418
        %v420 = vshll.u32 2475754826, %v414
        %v421 = vshrl.u32 2131351028, %v415
        %v422 = vor.u32 %v420, %v421
        %v423 = vshll.u32 2131351028, %v414
        %v424 = vshrl.u32 2102212464, %v415
        %v425 = vor.u32 %v423, %v424
        %v426 = vshll.u32 2102212464, %v414
        %v427 = vshrl.u32 920167782, %v415
        %v428 = vor.u32 %v426, %v427
        %v429 = vshll.u32 920167782, %v414
        %v430 = vshrl.u32 1326507024, %v415
        %v431 = vor.u32 %v429, %v430
        %vm432 = vcmp.lt.s32.totalorder %v413, 1
        %vm433 = vcmp.lt.s32.totalorder %v413, 2
        %vm434 = vcmp.lt.s32.totalorder %v413, 3
        %vm435 = vcmp.lt.s32.totalorder %v413, 4
        %v436 = vsel %vm432, %v416, %v419
        %v437 = vsel %vm435, %v425, 2102212464
        %v438 = vsel %vm434, %v422, %v437
        %v439 = vsel %vm433, %v436, %v438
        %v440 = vsel %vm432, %v419, %v422
        %v441 = vsel %vm435, %v428, 920167782
        %v442 = vsel %vm434, %v425, %v441
        %v443 = vsel %vm433, %v440, %v442
        %v444 = vsel %vm432, %v422, %v425
        %v445 = vsel %vm435, %v431, 1326507024
        %v446 = vsel %vm434, %v428, %v445
        %v447 = vsel %vm433, %v444, %v446
        %v448 = vshll.u32 %v408, 8
        %v449 = vmul.u32.u64.compose %v448, %v447
        %v450 = vextract.low.u32 %v449
        %v451 = vextract.high.u32 %v449
        %v452 = vmul.u32.u64.compose %v448, %v443
        %v453 = vextract.low.u32 %v452
        %v454 = vextract.high.u32 %v452
        %v455 = vmul.u32 %v448, %v439
        %v456 = vadd.s32 %v451, %v453
        %vm457 = vc.u32 %v451, %v453
        %v458 = vadd.s32 %v454, 1
        %v459 = vsel %vm457, %v458, %v454
        %v460 = vadd.s32 %v455, %v459
        %v461 = vadd.s32 %v460, 536870912
        %v462 = vshrl.u32 %v461, 30
        %v463 = vshll.u32 %v462, 30
        %v464 = vsub.s32 %v460, %v463
        %vm465 = vcmp.lt.s32.totalorder %v464, 0
        %v466 = vsub.s32 0, %v464
        %v467 = vsel %vm465, %v466, %v464
        %v468 = vclz %v467
        %v469 = vsub.s32 %v468, 2
        %vm470 = vcmp.gt.s32.totalorder 0, %v469
        %v471 = vsel %vm470, 0, %v469
        %v472 = vsub.s32 32, %v471
        %v473 = vshll.u32 %v464, %v471
        %v474 = vshrl.u32 %v456, %v472
        %v475 = vor.u32 %v473, %v474
        %v476 = vsub.s32 4294967266, %v471
        %v477 = vadd.s32 %v476, 127
        %v478 = vshll.u32 %v477, 23
        %v479 = vor.u32 4788187, %v478
        %v480 = vand.u32 2147483647, %v479
        %v482 = vcvt.s32.f32 %v475
        %v483 = vmul.f32 %v482, %v480
        %v484 = vxor.u32 %v483, 2147483648
        %v485 = vsel %vm402, %v484, %v483
        %v486 = vsub.s32 4, %v462
        %v487 = vsel %vm402, %v486, %v462
        %v488 = vsel %vm401, %v295, %v485
        %v489 = vsel %vm401, 0, %v487
        %v490 = vcosq.f32.pop %v488
        %v491 = vsinq.f32.pop %v488
        %vm492 = vweird.f32 %v295
        %v493 = vadd.s32 %v489, 3
        %v494 = vand.u32 %v493, 3
        %vm495 = vcmp.lt.s32.totalorder %v494, 2
        %vm496 = vcmp.eq.s32.totalorder %v494, 0
        %v497 = vxor.u32 %v491, 2147483648
        %v498 = vsel %vm496, %v490, %v497
        %vm499 = vcmp.eq.s32.totalorder %v494, 2
        %v500 = vxor.u32 %v490, 2147483648
        %v501 = vsel %vm499, %v500, %v491
        %v502 = vsel %vm495, %v498, %v501
        %v503 = vsel %vm492, nan, %v502
        %v504 = vand.u32 2147483647, %v294
        %vm505 = vcmp.le.f32.partialorder %v504, 0.7853982
        %vm506 = vcmp.lt.s32.totalorder %v294, 0
        %v507 = vand.u32 %v294, 2139095040
        %v508 = vshrl.u32 %v507, 23
        %v509 = vsub.s32 %v508, 127
        %v510 = vand.u32 2147483647, %v294
        %v511 = vand.u32 %v510, 8388607
        %v512 = vor.u32 %v511, 8388608
        %v513 = vsub.s32 0, %v512
        %v514 = vadd.s32 %v509, 1
        %vm515 = vcmp.gt.s32.totalorder %v514, 0
        %v516 = vsel %vm515, %v514, 0
        %v517 = vshrl.u32 %v516, 5
        %v518 = vand.u32 %v516, 31
        %v519 = vsub.s32 32, %v518
        %v520 = vshrl.u32 683565275, %v519
        %v521 = vshll.u32 683565275, %v518
        %v522 = vshrl.u32 2475754826, %v519
        %v523 = vor.u32 %v521, %v522
        %v524 = vshll.u32 2475754826, %v518
        %v525 = vshrl.u32 2131351028, %v519
        %v526 = vor.u32 %v524, %v525
        %v527 = vshll.u32 2131351028, %v518
        %v528 = vshrl.u32 2102212464, %v519
        %v529 = vor.u32 %v527, %v528
        %v530 = vshll.u32 2102212464, %v518
        %v531 = vshrl.u32 920167782, %v519
        %v532 = vor.u32 %v530, %v531
        %v533 = vshll.u32 920167782, %v518
        %v534 = vshrl.u32 1326507024, %v519
        %v535 = vor.u32 %v533, %v534
        %vm536 = vcmp.lt.s32.totalorder %v517, 1
        %vm537 = vcmp.lt.s32.totalorder %v517, 2
        %vm538 = vcmp.lt.s32.totalorder %v517, 3
        %vm539 = vcmp.lt.s32.totalorder %v517, 4
        %v540 = vsel %vm536, %v520, %v523
        %v541 = vsel %vm539, %v529, 2102212464
        %v542 = vsel %vm538, %v526, %v541
        %v543 = vsel %vm537, %v540, %v542
        %v544 = vsel %vm536, %v523, %v526
        %v545 = vsel %vm539, %v532, 920167782
        %v546 = vsel %vm538, %v529, %v545
        %v547 = vsel %vm537, %v544, %v546
        %v548 = vsel %vm536, %v526, %v529
        %v549 = vsel %vm539, %v535, 1326507024
        %v550 = vsel %vm538, %v532, %v549
        %v551 = vsel %vm537, %v548, %v550
        %v552 = vshll.u32 %v512, 8
        %v553 = vmul.u32.u64.compose %v552, %v551
        %v554 = vextract.low.u32 %v553
        %v555 = vextract.high.u32 %v553
        %v556 = vmul.u32.u64.compose %v552, %v547
        %v557 = vextract.low.u32 %v556
        %v558 = vextract.high.u32 %v556
        %v559 = vmul.u32 %v552, %v543
        %v560 = vadd.s32 %v555, %v557
        %vm561 = vc.u32 %v555, %v557
        %v562 = vadd.s32 %v558, 1
        %v563 = vsel %vm561, %v562, %v558
        %v564 = vadd.s32 %v559, %v563
        %v565 = vadd.s32 %v564, 536870912
        %v566 = vshrl.u32 %v565, 30
        %v567 = vshll.u32 %v566, 30
        %v568 = vsub.s32 %v564, %v567
        %vm569 = vcmp.lt.s32.totalorder %v568, 0
        %v570 = vsub.s32 0, %v568
        %v571 = vsel %vm569, %v570, %v568
        %v572 = vclz %v571
        %v573 = vsub.s32 %v572, 2
        %vm574 = vcmp.gt.s32.totalorder 0, %v573
        %v575 = vsel %vm574, 0, %v573
        %v576 = vsub.s32 32, %v575
        %v577 = vshll.u32 %v568, %v575
        %v578 = vshrl.u32 %v560, %v576
        %v579 = vor.u32 %v577, %v578
        %v580 = vsub.s32 4294967266, %v575
        %v581 = vadd.s32 %v580, 127
        %v582 = vshll.u32 %v581, 23
        %v583 = vor.u32 4788187, %v582
        %v584 = vand.u32 2147483647, %v583
        %v586 = vcvt.s32.f32 %v579
        %v587 = vmul.f32 %v586, %v584
        %v588 = vxor.u32 %v587, 2147483648
        %v589 = vsel %vm506, %v588, %v587
        %v590 = vsub.s32 4, %v566
        %v591 = vsel %vm506, %v590, %v566
        %v592 = vsel %vm505, %v294, %v589
        %v593 = vsel %vm505, 0, %v591
        %v594 = vcosq.f32.pop %v592
        %v595 = vsinq.f32.pop %v592
        %vm596 = vweird.f32 %v294
        %v597 = vand.u32 %v593, 3
        %vm598 = vcmp.lt.s32.totalorder %v597, 2
        %vm599 = vcmp.eq.s32.totalorder %v597, 0
        %v600 = vxor.u32 %v595, 2147483648
        %v601 = vsel %vm599, %v594, %v600
        %vm602 = vcmp.eq.s32.totalorder %v597, 2
        %v603 = vxor.u32 %v594, 2147483648
        %v604 = vsel %vm602, %v603, %v595
        %v605 = vsel %vm598, %v601, %v604
        %v606 = vsel %vm596, nan, %v605
        %v607 = vand.u32 2147483647, %v295
        %vm608 = vcmp.le.f32.partialorder %v607, 0.7853982
        %vm609 = vcmp.lt.s32.totalorder %v295, 0
        %v610 = vand.u32 %v295, 2139095040
        %v611 = vshrl.u32 %v610, 23
        %v612 = vsub.s32 %v611, 127
        %v613 = vand.u32 2147483647, %v295
        %v614 = vand.u32 %v613, 8388607
        %v615 = vor.u32 %v614, 8388608
        %v616 = vsub.s32 0, %v615
        %v617 = vadd.s32 %v612, 1
        %vm618 = vcmp.gt.s32.totalorder %v617, 0
        %v619 = vsel %vm618, %v617, 0
        %v620 = vshrl.u32 %v619, 5
        %v621 = vand.u32 %v619, 31
        %v622 = vsub.s32 32, %v621
        %v623 = vshrl.u32 683565275, %v622
        %v624 = vshll.u32 683565275, %v621
        %v625 = vshrl.u32 2475754826, %v622
        %v626 = vor.u32 %v624, %v625
        %v627 = vshll.u32 2475754826, %v621
        %v628 = vshrl.u32 2131351028, %v622
        %v629 = vor.u32 %v627, %v628
        %v630 = vshll.u32 2131351028, %v621
        %v631 = vshrl.u32 2102212464, %v622
        %v632 = vor.u32 %v630, %v631
        %v633 = vshll.u32 2102212464, %v621
        %v634 = vshrl.u32 920167782, %v622
        %v635 = vor.u32 %v633, %v634
        %v636 = vshll.u32 920167782, %v621
        %v637 = vshrl.u32 1326507024, %v622
        %v638 = vor.u32 %v636, %v637
        %vm639 = vcmp.lt.s32.totalorder %v620, 1
        %vm640 = vcmp.lt.s32.totalorder %v620, 2
        %vm641 = vcmp.lt.s32.totalorder %v620, 3
        %vm642 = vcmp.lt.s32.totalorder %v620, 4
        %v643 = vsel %vm639, %v623, %v626
        %v644 = vsel %vm642, %v632, 2102212464
        %v645 = vsel %vm641, %v629, %v644
        %v646 = vsel %vm640, %v643, %v645
        %v647 = vsel %vm639, %v626, %v629
        %v648 = vsel %vm642, %v635, 920167782
        %v649 = vsel %vm641, %v632, %v648
        %v650 = vsel %vm640, %v647, %v649
        %v651 = vsel %vm639, %v629, %v632
        %v652 = vsel %vm642, %v638, 1326507024
        %v653 = vsel %vm641, %v635, %v652
        %v654 = vsel %vm640, %v651, %v653
        %v655 = vshll.u32 %v615, 8
        %v656 = vmul.u32.u64.compose %v655, %v654
        %v657 = vextract.low.u32 %v656
        %v658 = vextract.high.u32 %v656
        %v659 = vmul.u32.u64.compose %v655, %v650
        %v660 = vextract.low.u32 %v659
        %v661 = vextract.high.u32 %v659
        %v662 = vmul.u32 %v655, %v646
        %v663 = vadd.s32 %v658, %v660
        %vm664 = vc.u32 %v658, %v660
        %v665 = vadd.s32 %v661, 1
        %v666 = vsel %vm664, %v665, %v661
        %v667 = vadd.s32 %v662, %v666
        %v668 = vadd.s32 %v667, 536870912
        %v669 = vshrl.u32 %v668, 30
        %v670 = vshll.u32 %v669, 30
        %v671 = vsub.s32 %v667, %v670
        %vm672 = vcmp.lt.s32.totalorder %v671, 0
        %v673 = vsub.s32 0, %v671
        %v674 = vsel %vm672, %v673, %v671
        %v675 = vclz %v674
        %v676 = vsub.s32 %v675, 2
        %vm677 = vcmp.gt.s32.totalorder 0, %v676
        %v678 = vsel %vm677, 0, %v676
        %v679 = vsub.s32 32, %v678
        %v680 = vshll.u32 %v671, %v678
        %v681 = vshrl.u32 %v663, %v679
        %v682 = vor.u32 %v680, %v681
        %v683 = vsub.s32 4294967266, %v678
        %v684 = vadd.s32 %v683, 127
        %v685 = vshll.u32 %v684, 23
        %v686 = vor.u32 4788187, %v685
        %v687 = vand.u32 2147483647, %v686
        %v689 = vcvt.s32.f32 %v682
        %v690 = vmul.f32 %v689, %v687
        %v691 = vxor.u32 %v690, 2147483648
        %v692 = vsel %vm609, %v691, %v690
        %v693 = vsub.s32 4, %v669
        %v694 = vsel %vm609, %v693, %v669
        %v695 = vsel %vm608, %v295, %v692
        %v696 = vsel %vm608, 0, %v694
        %v697 = vcosq.f32.pop %v695
        %v698 = vsinq.f32.pop %v695
        %vm699 = vweird.f32 %v295
        %v700 = vand.u32 %v696, 3
        %vm701 = vcmp.lt.s32.totalorder %v700, 2
        %vm702 = vcmp.eq.s32.totalorder %v700, 0
        %v703 = vxor.u32 %v698, 2147483648
        %v704 = vsel %vm702, %v697, %v703
        %vm705 = vcmp.eq.s32.totalorder %v700, 2
        %v706 = vxor.u32 %v697, 2147483648
        %v707 = vsel %vm705, %v706, %v698
        %v708 = vsel %vm701, %v704, %v707
        %v709 = vsel %vm699, nan, %v708
        %v711 = vunpack.c.l.s4 1983009808
        %v712 = vunpack.c.0.s8 %v711
        %v713 = vlaneseq
        %v714 = vshrl.u32 %v713, 7
        %v715 = vsub.s32 %v712, %v714
        %v716 = vrot.slane %v241, %v715
        %v717 = vcombine.high %v716, %v716
        %vm720 = vcmask 1041408
        %v721 = vsel %vm720, %v716, 0.0
        %v722 = vsel %vm720, %v717, 0.0
        %723 = vst [vmem:[#allocation2] sm:$0xff] 0.0
        %724 = vst [vmem:[#allocation2 + $0x8] sm:$0xff] 0.0
        %725 = vst [vmem:[#allocation2 + $0x10] sm:$0xff] 0.0
        %726 = vst [vmem:[#allocation2 + $0x18] sm:$0xff] 0.0
        %727 = vst [vmem:[#allocation2 + $0x20] sm:$0xff] 0.0
        %728 = vst [vmem:[#allocation2 + $0x28] sm:$0xff] 0.0
        %729 = vst [vmem:[#allocation2 + $0x30] sm:$0xff] 0.0
        %730 = vst [vmem:[#allocation2 + $0x38] sm:$0xff] 0.0
        %731 = vst [vmem:[#allocation2 + $0x40] sm:$0xff] 0.0
        %732 = vst [vmem:[#allocation2 + $0x48] sm:$0xff] 0.0
        %733 = vst [vmem:[#allocation2 + $0x50] sm:$0xff] 0.0
        %734 = vst [vmem:[#allocation2 + $0x58] sm:$0xff] 0.0
        %735 = vst [vmem:[#allocation2 + $0x60] sm:$0xff] 0.0
        %736 = vst [vmem:[#allocation2 + $0x68] sm:$0xff] 0.0
        %737 = vst [vmem:[#allocation2 + $0x70] sm:$0xff] 0.0
        %738 = vst [vmem:[#allocation2 + $0x78] sm:$0xff] 0.0
        %739 = vst [vmem:[#allocation2 + $0x80] sm:$0xff] %v399
        %740 = vst [vmem:[#allocation2 + $0x88] sm:$0xff] %v503
        %741 = vst [vmem:[#allocation2 + $0x90] sm:$0xff] %v606
        %742 = vst [vmem:[#allocation2 + $0x98] sm:$0xff] %v709
        %743 = vst [vmem:[#allocation2 + $0xa0] sm:$0xff] %v721
        %744 = vst [vmem:[#allocation2 + $0xa8] sm:$0xff] %v722
        %745 = vst [vmem:[#allocation2 + $0xb0] sm:$0xff] 0.0
        %746 = vst [vmem:[#allocation2 + $0xb8] sm:$0xff] 0.0
        %747 = vst [vmem:[#allocation2 + $0xc0] sm:$0xff] 0.0
        %748 = vst [vmem:[#allocation2 + $0xc8] sm:$0xff] 0.0
        %749 = vst [vmem:[#allocation2 + $0xd0] sm:$0xff] 0.0
        %750 = vst [vmem:[#allocation2 + $0xd8] sm:$0xff] 0.0
        %751 = vst [vmem:[#allocation2 + $0xe0] sm:$0xff] 0.0
        %752 = vst [vmem:[#allocation2 + $0xe8] sm:$0xff] 0.0
        %753 = vst [vmem:[#allocation2 + $0xf0] sm:$0xff] 0.0
        %754 = vst [vmem:[#allocation2 + $0xf8] sm:$0xff] 0.0
        %v755 = vld [vmem:[%s1] sm:$0xff]
        %v756 = vld [vmem:[%s1 + $0x8] sm:$0xff]
        %v757 = vld [vmem:[%s1 + $0x10] sm:$0xff]
        %v758 = vld [vmem:[%s1 + $0x18] sm:$0xff]
        %v759 = vld [vmem:[#allocation2] sm:$0xff]
        %v760 = vld [vmem:[#allocation2 + $0x8] sm:$0xff]
        %v761 = vld [vmem:[#allocation2 + $0x10] sm:$0xff]
        %v762 = vld [vmem:[#allocation2 + $0x18] sm:$0xff]
        %v763 = vld [vmem:[#allocation2 + $0x20] sm:$0xff]
        %v764 = vld [vmem:[#allocation2 + $0x28] sm:$0xff]
        %v765 = vld [vmem:[#allocation2 + $0x30] sm:$0xff]
        %v766 = vld [vmem:[#allocation2 + $0x38] sm:$0xff]
        %v767 = vld [vmem:[#allocation2 + $0x40] sm:$0xff]
        %v768 = vld [vmem:[#allocation2 + $0x48] sm:$0xff]
        %v769 = vld [vmem:[#allocation2 + $0x50] sm:$0xff]
        %v770 = vld [vmem:[#allocation2 + $0x58] sm:$0xff]
        %v771 = vld [vmem:[#allocation2 + $0x60] sm:$0xff]
        %v772 = vld [vmem:[#allocation2 + $0x68] sm:$0xff]
        %v773 = vld [vmem:[#allocation2 + $0x70] sm:$0xff]
        %v774 = vld [vmem:[#allocation2 + $0x78] sm:$0xff]
        %v775 = vld [vmem:[#allocation2 + $0x80] sm:$0xff]
        %v776 = vld [vmem:[#allocation2 + $0x88] sm:$0xff]
        %v777 = vld [vmem:[#allocation2 + $0x90] sm:$0xff]
        %v778 = vld [vmem:[#allocation2 + $0x98] sm:$0xff]
        %v779 = vld [vmem:[#allocation2 + $0xa0] sm:$0xff]
        %v780 = vld [vmem:[#allocation2 + $0xa8] sm:$0xff]
        %v781 = vld [vmem:[#allocation2 + $0xb0] sm:$0xff]
        %v782 = vld [vmem:[#allocation2 + $0xb8] sm:$0xff]
        %v783 = vld [vmem:[#allocation2 + $0xc0] sm:$0xff]
        %v784 = vld [vmem:[#allocation2 + $0xc8] sm:$0xff]
        %v785 = vld [vmem:[#allocation2 + $0xd0] sm:$0xff]
        %v786 = vld [vmem:[#allocation2 + $0xd8] sm:$0xff]
        %v787 = vld [vmem:[#allocation2 + $0xe0] sm:$0xff]
        %v788 = vld [vmem:[#allocation2 + $0xe8] sm:$0xff]
        %v789 = vld [vmem:[#allocation2 + $0xf0] sm:$0xff]
        %v790 = vld [vmem:[#allocation2 + $0xf8] sm:$0xff]
        %v791 = vld [vmem:[%s2] sm:$0xff]
        %v792 = vld [vmem:[%s2 + $0x8] sm:$0xff]
        %v793 = vld [vmem:[%s2 + $0x10] sm:$0xff]
        %v794 = vld [vmem:[%s2 + $0x18] sm:$0xff]
        %796 = vset.pattern.permute.xlu0 0
        %797 = vperm.xlu0 %796, %v791
        %v798 = vpop.permute.xlu0 %797
        %801 = vset.pattern.permute.xlu0 0
        %802 = vperm.xlu0 %801, %v792
        %v803 = vpop.permute.xlu0 %802
        %806 = vset.pattern.permute.xlu0 0
        %807 = vperm.xlu0 %806, %v793
        %v808 = vpop.permute.xlu0 %807
        %811 = vset.pattern.permute.xlu0 0
        %812 = vperm.xlu0 %811, %v794
        %v813 = vpop.permute.xlu0 %812
        %815 = vmatprep.subr.mxu0 %v790
        %816 = vmatpush1.msra.mxu0 %v789
        %817 = vmatprep.subr.mxu0 %v788
        %818 = vmatpush1.msra.mxu0 %v787
        %819 = vmatprep.subr.mxu0 %v786
        %820 = vmatpush1.msra.mxu0 %v785
        %821 = vmatprep.subr.mxu0 %v784
        %822 = vmatpush1.msra.mxu0 %v783
        %823 = vmatprep.subr.mxu0 %v782
        %824 = vmatpush1.msra.mxu0 %v781
        %825 = vmatprep.subr.mxu0 %v780
        %826 = vmatpush1.msra.mxu0 %v779
        %827 = vmatprep.subr.mxu0 %v778
        %828 = vmatpush1.msra.mxu0 %v777
        %829 = vmatprep.subr.mxu0 %v776
        %830 = vmatpush1.msra.mxu0 %v775
        %831 = vmatprep.subr.mxu0 %v774
        %832 = vmatpush1.msra.mxu0 %v773
        %833 = vmatprep.subr.mxu0 %v772
        %834 = vmatpush1.msra.mxu0 %v771
        %835 = vmatprep.subr.mxu0 %v770
        %836 = vmatpush1.msra.mxu0 %v769
        %837 = vmatprep.subr.mxu0 %v768
        %838 = vmatpush1.msra.mxu0 %v767
        %839 = vmatprep.subr.mxu0 %v766
        %840 = vmatpush1.msra.mxu0 %v765
        %841 = vmatprep.subr.mxu0 %v764
        %842 = vmatpush1.msra.mxu0 %v763
        %843 = vmatprep.subr.mxu0 %v762
        %844 = vmatpush1.msra.mxu0 %v761
        %845 = vmatprep.subr.mxu0 %v760
        %846 = vmatpush1.msra.mxu0 %v759
        %847 = vmatprep.subr.mxu0 0.0
        %848 = vmatpush2.msra.mxu0 0.0
        %849 = vmatprep.subr.mxu0 0.0
        %850 = vmatpush2.msra.mxu0 0.0
        %851 = vmatprep.subr.mxu0 0.0
        %852 = vmatpush2.msra.mxu0 0.0
        %853 = vmatprep.subr.mxu0 0.0
        %854 = vmatpush2.msra.mxu0 0.0
        %855 = vmatprep.subr.mxu0 0.0
        %856 = vmatpush2.msra.mxu0 0.0
        %857 = vmatprep.subr.mxu0 0.0
        %858 = vmatpush2.msra.mxu0 0.0
        %859 = vmatprep.subr.mxu0 0.0
        %860 = vmatpush2.msra.mxu0 0.0
        %861 = vmatprep.subr.mxu0 0.0
        %862 = vmatpush2.msra.mxu0 0.0
        %863 = vmatprep.subr.mxu0 0.0
        %864 = vmatpush2.msra.mxu0 0.0
        %865 = vmatprep.subr.mxu0 0.0
        %866 = vmatpush2.msra.mxu0 0.0
        %867 = vmatprep.subr.mxu0 0.0
        %868 = vmatpush2.msra.mxu0 0.0
        %869 = vmatprep.subr.mxu0 0.0
        %870 = vmatpush2.msra.mxu0 0.0
        %871 = vmatprep.subr.mxu0 0.0
        %872 = vmatpush2.msra.mxu0 0.0
        %873 = vmatprep.subr.mxu0 0.0
        %874 = vmatpush2.msra.mxu0 0.0
        %875 = vmatprep.subr.mxu0 0.0
        %876 = vmatpush2.msra.mxu0 0.0
        %877 = vmatprep.subr.mxu0 0.0
        %878 = vmatpush2.msra.mxu0 0.0
        %879 = vmatprep.mubr.f32.mxu0 0.0
        %880 = vmatmul.mubr.f32.gmra.mxu0 %v755
        %v881 = vpop.f32.mrf.mxu0
        %v882 = vadd.f32 %v798, %v881
        %v883 = vpop.f32.mrf.mxu0
        %v884 = vadd.f32 %v798, %v883
        %885 = vmatprep.mubr.f32.mxu0 0.0
        %886 = vmatmul.mubr.f32.gmra.mxu0 %v756
        %v887 = vpop.f32.mrf.mxu0
        %v888 = vadd.f32 %v803, %v887
        %v889 = vpop.f32.mrf.mxu0
        %v890 = vadd.f32 %v803, %v889
        %891 = vmatprep.mubr.f32.mxu0 0.0
        %892 = vmatmul.mubr.f32.gmra.mxu0 %v757
        %v893 = vpop.f32.mrf.mxu0
        %v894 = vadd.f32 %v808, %v893
        %v895 = vpop.f32.mrf.mxu0
        %v896 = vadd.f32 %v808, %v895
        %897 = vmatprep.mubr.f32.mxu0 0.0
        %898 = vmatmul.mubr.f32.gmra.mxu0 %v758
        %v899 = vpop.f32.mrf.mxu0
        %v900 = vadd.f32 %v813, %v899
        %v901 = vpop.f32.mrf.mxu0
        %v902 = vadd.f32 %v813, %v901
        %903 = vdwg.mxu0
        %vm904 = vcmp.gt.f32.partialorder %v882, 0.0
        %vm905 = vcmp.gt.f32.partialorder %v884, 0.0
        %vm906 = vcmp.gt.f32.partialorder %v888, 0.0
        %vm907 = vcmp.gt.f32.partialorder %v890, 0.0
        %vm908 = vcmp.gt.f32.partialorder %v894, 0.0
        %vm909 = vcmp.gt.f32.partialorder %v896, 0.0
        %vm910 = vcmp.gt.f32.partialorder %v900, 0.0
        %vm911 = vcmp.gt.f32.partialorder %v902, 0.0
        %v912 = vmul.f32 %v882, 0.01
        %v913 = vmul.f32 %v884, 0.01
        %v914 = vmul.f32 %v888, 0.01
        %v915 = vmul.f32 %v890, 0.01
        %v916 = vmul.f32 %v894, 0.01
        %v917 = vmul.f32 %v896, 0.01
        %v918 = vmul.f32 %v900, 0.01
        %v919 = vmul.f32 %v902, 0.01
        %v920 = vsel %vm904, %v882, %v912
        %v921 = vsel %vm905, %v884, %v913
        %v922 = vsel %vm906, %v888, %v914
        %v923 = vsel %vm907, %v890, %v915
        %v924 = vsel %vm908, %v894, %v916
        %v925 = vsel %vm909, %v896, %v917
        %v926 = vsel %vm910, %v900, %v918
        %v927 = vsel %vm911, %v902, %v919
        %928 = vst [vmem:[#allocation2] sm:$0xff] %v920
        %929 = vst [vmem:[#allocation2 + $0x8] sm:$0xff] %v921
        %930 = vst [vmem:[#allocation2 + $0x10] sm:$0xff] %v922
        %931 = vst [vmem:[#allocation2 + $0x18] sm:$0xff] %v923
        %932 = vst [vmem:[#allocation2 + $0x20] sm:$0xff] %v924
        %933 = vst [vmem:[#allocation2 + $0x28] sm:$0xff] %v925
        %934 = vst [vmem:[#allocation2 + $0x30] sm:$0xff] %v926
        %935 = vst [vmem:[#allocation2 + $0x38] sm:$0xff] %v927
        %s936 = scalar_lea.vmem %s1, 32
        %v937 = vld [vmem:[%s936] sm:$0xff]
        %v938 = vld [vmem:[%s936 + $0x8] sm:$0xff]
        %v939 = vld [vmem:[%s936 + $0x10] sm:$0xff]
        %v940 = vld [vmem:[%s936 + $0x18] sm:$0xff]
        %v941 = vld [vmem:[#allocation2] sm:$0xff]
        %v942 = vld [vmem:[#allocation2 + $0x8] sm:$0xff]
        %v943 = vld [vmem:[#allocation2 + $0x10] sm:$0xff]
        %v944 = vld [vmem:[#allocation2 + $0x18] sm:$0xff]
        %v945 = vld [vmem:[#allocation2 + $0x20] sm:$0xff]
        %v946 = vld [vmem:[#allocation2 + $0x28] sm:$0xff]
        %v947 = vld [vmem:[#allocation2 + $0x30] sm:$0xff]
        %v948 = vld [vmem:[#allocation2 + $0x38] sm:$0xff]
        %v949 = vld [vmem:[#allocation2 + $0x40] sm:$0xff]
        %v950 = vld [vmem:[#allocation2 + $0x48] sm:$0xff]
        %v951 = vld [vmem:[#allocation2 + $0x50] sm:$0xff]
        %v952 = vld [vmem:[#allocation2 + $0x58] sm:$0xff]
        %v953 = vld [vmem:[#allocation2 + $0x60] sm:$0xff]
        %v954 = vld [vmem:[#allocation2 + $0x68] sm:$0xff]
        %v955 = vld [vmem:[#allocation2 + $0x70] sm:$0xff]
        %v956 = vld [vmem:[#allocation2 + $0x78] sm:$0xff]
        %v957 = vld [vmem:[#allocation2 + $0x80] sm:$0xff]
        %v958 = vld [vmem:[#allocation2 + $0x88] sm:$0xff]
        %v959 = vld [vmem:[#allocation2 + $0x90] sm:$0xff]
        %v960 = vld [vmem:[#allocation2 + $0x98] sm:$0xff]
        %v961 = vld [vmem:[#allocation2 + $0xa0] sm:$0xff]
        %v962 = vld [vmem:[#allocation2 + $0xa8] sm:$0xff]
        %v963 = vld [vmem:[#allocation2 + $0xb0] sm:$0xff]
        %v964 = vld [vmem:[#allocation2 + $0xb8] sm:$0xff]
        %v965 = vld [vmem:[#allocation2 + $0xc0] sm:$0xff]
        %v966 = vld [vmem:[#allocation2 + $0xc8] sm:$0xff]
        %v967 = vld [vmem:[#allocation2 + $0xd0] sm:$0xff]
        %v968 = vld [vmem:[#allocation2 + $0xd8] sm:$0xff]
        %v969 = vld [vmem:[#allocation2 + $0xe0] sm:$0xff]
        %v970 = vld [vmem:[#allocation2 + $0xe8] sm:$0xff]
        %v971 = vld [vmem:[#allocation2 + $0xf0] sm:$0xff]
        %v972 = vld [vmem:[#allocation2 + $0xf8] sm:$0xff]
        %s973 = scalar_lea.vmem %s2, 32
        %v974 = vld [vmem:[%s973] sm:$0xff]
        %v975 = vld [vmem:[%s973 + $0x8] sm:$0xff]
        %v976 = vld [vmem:[%s973 + $0x10] sm:$0xff]
        %v977 = vld [vmem:[%s973 + $0x18] sm:$0xff]
        %979 = vset.pattern.permute.xlu0 0
        %980 = vperm.xlu0 %979, %v974
        %v981 = vpop.permute.xlu0 %980
        %984 = vset.pattern.permute.xlu0 0
        %985 = vperm.xlu0 %984, %v975
        %v986 = vpop.permute.xlu0 %985
        %989 = vset.pattern.permute.xlu0 0
        %990 = vperm.xlu0 %989, %v976
        %v991 = vpop.permute.xlu0 %990
        %994 = vset.pattern.permute.xlu0 0
        %995 = vperm.xlu0 %994, %v977
        %v996 = vpop.permute.xlu0 %995
        %998 = vmatprep.subr.mxu0 %v972
        %999 = vmatpush1.msra.mxu0 %v971
        %1000 = vmatprep.subr.mxu0 %v970
        %1001 = vmatpush1.msra.mxu0 %v969
        %1002 = vmatprep.subr.mxu0 %v968
        %1003 = vmatpush1.msra.mxu0 %v967
        %1004 = vmatprep.subr.mxu0 %v966
        %1005 = vmatpush1.msra.mxu0 %v965
        %1006 = vmatprep.subr.mxu0 %v964
        %1007 = vmatpush1.msra.mxu0 %v963
        %1008 = vmatprep.subr.mxu0 %v962
        %1009 = vmatpush1.msra.mxu0 %v961
        %1010 = vmatprep.subr.mxu0 %v960
        %1011 = vmatpush1.msra.mxu0 %v959
        %1012 = vmatprep.subr.mxu0 %v958
        %1013 = vmatpush1.msra.mxu0 %v957
        %1014 = vmatprep.subr.mxu0 %v956
        %1015 = vmatpush1.msra.mxu0 %v955
        %1016 = vmatprep.subr.mxu0 %v954
        %1017 = vmatpush1.msra.mxu0 %v953
        %1018 = vmatprep.subr.mxu0 %v952
        %1019 = vmatpush1.msra.mxu0 %v951
        %1020 = vmatprep.subr.mxu0 %v950
        %1021 = vmatpush1.msra.mxu0 %v949
        %1022 = vmatprep.subr.mxu0 %v948
        %1023 = vmatpush1.msra.mxu0 %v947
        %1024 = vmatprep.subr.mxu0 %v946
        %1025 = vmatpush1.msra.mxu0 %v945
        %1026 = vmatprep.subr.mxu0 %v944
        %1027 = vmatpush1.msra.mxu0 %v943
        %1028 = vmatprep.subr.mxu0 %v942
        %1029 = vmatpush1.msra.mxu0 %v941
        %1030 = vmatprep.subr.mxu0 0.0
        %1031 = vmatpush2.msra.mxu0 0.0
        %1032 = vmatprep.subr.mxu0 0.0
        %1033 = vmatpush2.msra.mxu0 0.0
        %1034 = vmatprep.subr.mxu0 0.0
        %1035 = vmatpush2.msra.mxu0 0.0
        %1036 = vmatprep.subr.mxu0 0.0
        %1037 = vmatpush2.msra.mxu0 0.0
        %1038 = vmatprep.subr.mxu0 0.0
        %1039 = vmatpush2.msra.mxu0 0.0
        %1040 = vmatprep.subr.mxu0 0.0
        %1041 = vmatpush2.msra.mxu0 0.0
        %1042 = vmatprep.subr.mxu0 0.0
        %1043 = vmatpush2.msra.mxu0 0.0
        %1044 = vmatprep.subr.mxu0 0.0
        %1045 = vmatpush2.msra.mxu0 0.0
        %1046 = vmatprep.subr.mxu0 0.0
        %1047 = vmatpush2.msra.mxu0 0.0
        %1048 = vmatprep.subr.mxu0 0.0
        %1049 = vmatpush2.msra.mxu0 0.0
        %1050 = vmatprep.subr.mxu0 0.0
        %1051 = vmatpush2.msra.mxu0 0.0
        %1052 = vmatprep.subr.mxu0 0.0
        %1053 = vmatpush2.msra.mxu0 0.0
        %1054 = vmatprep.subr.mxu0 0.0
        %1055 = vmatpush2.msra.mxu0 0.0
        %1056 = vmatprep.subr.mxu0 0.0
        %1057 = vmatpush2.msra.mxu0 0.0
        %1058 = vmatprep.subr.mxu0 0.0
        %1059 = vmatpush2.msra.mxu0 0.0
        %1060 = vmatprep.subr.mxu0 0.0
        %1061 = vmatpush2.msra.mxu0 0.0
        %1062 = vmatprep.mubr.f32.mxu0 0.0
        %1063 = vmatmul.mubr.f32.gmra.mxu0 %v937
        %v1064 = vpop.f32.mrf.mxu0
        %v1065 = vadd.f32 %v981, %v1064
        %v1066 = vpop.f32.mrf.mxu0
        %v1067 = vadd.f32 %v981, %v1066
        %1068 = vmatprep.mubr.f32.mxu0 0.0
        %1069 = vmatmul.mubr.f32.gmra.mxu0 %v938
        %v1070 = vpop.f32.mrf.mxu0
        %v1071 = vadd.f32 %v986, %v1070
        %v1072 = vpop.f32.mrf.mxu0
        %v1073 = vadd.f32 %v986, %v1072
        %1074 = vmatprep.mubr.f32.mxu0 0.0
        %1075 = vmatmul.mubr.f32.gmra.mxu0 %v939
        %v1076 = vpop.f32.mrf.mxu0
        %v1077 = vadd.f32 %v991, %v1076
        %v1078 = vpop.f32.mrf.mxu0
        %v1079 = vadd.f32 %v991, %v1078
        %1080 = vmatprep.mubr.f32.mxu0 0.0
        %1081 = vmatmul.mubr.f32.gmra.mxu0 %v940
        %v1082 = vpop.f32.mrf.mxu0
        %v1083 = vadd.f32 %v996, %v1082
        %v1084 = vpop.f32.mrf.mxu0
        %v1085 = vadd.f32 %v996, %v1084
        %1086 = vdwg.mxu0
        %vm1087 = vcmp.gt.f32.partialorder %v1065, 0.0
        %vm1088 = vcmp.gt.f32.partialorder %v1067, 0.0
        %vm1089 = vcmp.gt.f32.partialorder %v1071, 0.0
        %vm1090 = vcmp.gt.f32.partialorder %v1073, 0.0
        %vm1091 = vcmp.gt.f32.partialorder %v1077, 0.0
        %vm1092 = vcmp.gt.f32.partialorder %v1079, 0.0
        %vm1093 = vcmp.gt.f32.partialorder %v1083, 0.0
        %vm1094 = vcmp.gt.f32.partialorder %v1085, 0.0
        %v1095 = vmul.f32 %v1065, 0.01
        %v1096 = vmul.f32 %v1067, 0.01
        %v1097 = vmul.f32 %v1071, 0.01
        %v1098 = vmul.f32 %v1073, 0.01
        %v1099 = vmul.f32 %v1077, 0.01
        %v1100 = vmul.f32 %v1079, 0.01
        %v1101 = vmul.f32 %v1083, 0.01
        %v1102 = vmul.f32 %v1085, 0.01
        %v1103 = vsel %vm1087, %v1065, %v1095
        %v1104 = vsel %vm1088, %v1067, %v1096
        %v1105 = vsel %vm1089, %v1071, %v1097
        %v1106 = vsel %vm1090, %v1073, %v1098
        %v1107 = vsel %vm1091, %v1077, %v1099
        %v1108 = vsel %vm1092, %v1079, %v1100
        %v1109 = vsel %vm1093, %v1083, %v1101
        %v1110 = vsel %vm1094, %v1085, %v1102
        %1111 = vst [vmem:[#allocation2 + $0x40] sm:$0xff] %v1103
        %1112 = vst [vmem:[#allocation2 + $0x48] sm:$0xff] %v1104
        %1113 = vst [vmem:[#allocation2 + $0x50] sm:$0xff] %v1105
        %1114 = vst [vmem:[#allocation2 + $0x58] sm:$0xff] %v1106
        %1115 = vst [vmem:[#allocation2 + $0x60] sm:$0xff] %v1107
        %1116 = vst [vmem:[#allocation2 + $0x68] sm:$0xff] %v1108
        %1117 = vst [vmem:[#allocation2 + $0x70] sm:$0xff] %v1109
        %1118 = vst [vmem:[#allocation2 + $0x78] sm:$0xff] %v1110
        %s1119 = scalar_lea.vmem %s1, 64
        %v1120 = vld [vmem:[%s1119] sm:$0xff]
        %v1121 = vld [vmem:[%s1119 + $0x8] sm:$0xff]
        %v1122 = vld [vmem:[%s1119 + $0x10] sm:$0xff]
        %v1123 = vld [vmem:[%s1119 + $0x18] sm:$0xff]
        %v1124 = vld [vmem:[#allocation2] sm:$0xff]
        %v1125 = vld [vmem:[#allocation2 + $0x8] sm:$0xff]
        %v1126 = vld [vmem:[#allocation2 + $0x10] sm:$0xff]
        %v1127 = vld [vmem:[#allocation2 + $0x18] sm:$0xff]
        %v1128 = vld [vmem:[#allocation2 + $0x20] sm:$0xff]
        %v1129 = vld [vmem:[#allocation2 + $0x28] sm:$0xff]
        %v1130 = vld [vmem:[#allocation2 + $0x30] sm:$0xff]
        %v1131 = vld [vmem:[#allocation2 + $0x38] sm:$0xff]
        %v1132 = vld [vmem:[#allocation2 + $0x40] sm:$0xff]
        %v1133 = vld [vmem:[#allocation2 + $0x48] sm:$0xff]
        %v1134 = vld [vmem:[#allocation2 + $0x50] sm:$0xff]
        %v1135 = vld [vmem:[#allocation2 + $0x58] sm:$0xff]
        %v1136 = vld [vmem:[#allocation2 + $0x60] sm:$0xff]
        %v1137 = vld [vmem:[#allocation2 + $0x68] sm:$0xff]
        %v1138 = vld [vmem:[#allocation2 + $0x70] sm:$0xff]
        %v1139 = vld [vmem:[#allocation2 + $0x78] sm:$0xff]
        %v1140 = vld [vmem:[#allocation2 + $0x80] sm:$0xff]
        %v1141 = vld [vmem:[#allocation2 + $0x88] sm:$0xff]
        %v1142 = vld [vmem:[#allocation2 + $0x90] sm:$0xff]
        %v1143 = vld [vmem:[#allocation2 + $0x98] sm:$0xff]
        %v1144 = vld [vmem:[#allocation2 + $0xa0] sm:$0xff]
        %v1145 = vld [vmem:[#allocation2 + $0xa8] sm:$0xff]
        %v1146 = vld [vmem:[#allocation2 + $0xb0] sm:$0xff]
        %v1147 = vld [vmem:[#allocation2 + $0xb8] sm:$0xff]
        %v1148 = vld [vmem:[#allocation2 + $0xc0] sm:$0xff]
        %v1149 = vld [vmem:[#allocation2 + $0xc8] sm:$0xff]
        %v1150 = vld [vmem:[#allocation2 + $0xd0] sm:$0xff]
        %v1151 = vld [vmem:[#allocation2 + $0xd8] sm:$0xff]
        %v1152 = vld [vmem:[#allocation2 + $0xe0] sm:$0xff]
        %v1153 = vld [vmem:[#allocation2 + $0xe8] sm:$0xff]
        %v1154 = vld [vmem:[#allocation2 + $0xf0] sm:$0xff]
        %v1155 = vld [vmem:[#allocation2 + $0xf8] sm:$0xff]
        %s1156 = scalar_lea.vmem %s2, 64
        %v1157 = vld [vmem:[%s1156] sm:$0xff]
        %v1158 = vld [vmem:[%s1156 + $0x8] sm:$0xff]
        %v1159 = vld [vmem:[%s1156 + $0x10] sm:$0xff]
        %v1160 = vld [vmem:[%s1156 + $0x18] sm:$0xff]
        %1162 = vset.pattern.permute.xlu0 0
        %1163 = vperm.xlu0 %1162, %v1157
        %v1164 = vpop.permute.xlu0 %1163
        %1167 = vset.pattern.permute.xlu0 0
        %1168 = vperm.xlu0 %1167, %v1158
        %v1169 = vpop.permute.xlu0 %1168
        %1172 = vset.pattern.permute.xlu0 0
        %1173 = vperm.xlu0 %1172, %v1159
        %v1174 = vpop.permute.xlu0 %1173
        %1177 = vset.pattern.permute.xlu0 0
        %1178 = vperm.xlu0 %1177, %v1160
        %v1179 = vpop.permute.xlu0 %1178
        %1181 = vmatprep.subr.mxu0 %v1155
        %1182 = vmatpush1.msra.mxu0 %v1154
        %1183 = vmatprep.subr.mxu0 %v1153
        %1184 = vmatpush1.msra.mxu0 %v1152
        %1185 = vmatprep.subr.mxu0 %v1151
        %1186 = vmatpush1.msra.mxu0 %v1150
        %1187 = vmatprep.subr.mxu0 %v1149
        %1188 = vmatpush1.msra.mxu0 %v1148
        %1189 = vmatprep.subr.mxu0 %v1147
        %1190 = vmatpush1.msra.mxu0 %v1146
        %1191 = vmatprep.subr.mxu0 %v1145
        %1192 = vmatpush1.msra.mxu0 %v1144
        %1193 = vmatprep.subr.mxu0 %v1143
        %1194 = vmatpush1.msra.mxu0 %v1142
        %1195 = vmatprep.subr.mxu0 %v1141
        %1196 = vmatpush1.msra.mxu0 %v1140
        %1197 = vmatprep.subr.mxu0 %v1139
        %1198 = vmatpush1.msra.mxu0 %v1138
        %1199 = vmatprep.subr.mxu0 %v1137
        %1200 = vmatpush1.msra.mxu0 %v1136
        %1201 = vmatprep.subr.mxu0 %v1135
        %1202 = vmatpush1.msra.mxu0 %v1134
        %1203 = vmatprep.subr.mxu0 %v1133
        %1204 = vmatpush1.msra.mxu0 %v1132
        %1205 = vmatprep.subr.mxu0 %v1131
        %1206 = vmatpush1.msra.mxu0 %v1130
        %1207 = vmatprep.subr.mxu0 %v1129
        %1208 = vmatpush1.msra.mxu0 %v1128
        %1209 = vmatprep.subr.mxu0 %v1127
        %1210 = vmatpush1.msra.mxu0 %v1126
        %1211 = vmatprep.subr.mxu0 %v1125
        %1212 = vmatpush1.msra.mxu0 %v1124
        %1213 = vmatprep.subr.mxu0 0.0
        %1214 = vmatpush2.msra.mxu0 0.0
        %1215 = vmatprep.subr.mxu0 0.0
        %1216 = vmatpush2.msra.mxu0 0.0
        %1217 = vmatprep.subr.mxu0 0.0
        %1218 = vmatpush2.msra.mxu0 0.0
        %1219 = vmatprep.subr.mxu0 0.0
        %1220 = vmatpush2.msra.mxu0 0.0
        %1221 = vmatprep.subr.mxu0 0.0
        %1222 = vmatpush2.msra.mxu0 0.0
        %1223 = vmatprep.subr.mxu0 0.0
        %1224 = vmatpush2.msra.mxu0 0.0
        %1225 = vmatprep.subr.mxu0 0.0
        %1226 = vmatpush2.msra.mxu0 0.0
        %1227 = vmatprep.subr.mxu0 0.0
        %1228 = vmatpush2.msra.mxu0 0.0
        %1229 = vmatprep.subr.mxu0 0.0
        %1230 = vmatpush2.msra.mxu0 0.0
        %1231 = vmatprep.subr.mxu0 0.0
        %1232 = vmatpush2.msra.mxu0 0.0
        %1233 = vmatprep.subr.mxu0 0.0
        %1234 = vmatpush2.msra.mxu0 0.0
        %1235 = vmatprep.subr.mxu0 0.0
        %1236 = vmatpush2.msra.mxu0 0.0
        %1237 = vmatprep.subr.mxu0 0.0
        %1238 = vmatpush2.msra.mxu0 0.0
        %1239 = vmatprep.subr.mxu0 0.0
        %1240 = vmatpush2.msra.mxu0 0.0
        %1241 = vmatprep.subr.mxu0 0.0
        %1242 = vmatpush2.msra.mxu0 0.0
        %1243 = vmatprep.subr.mxu0 0.0
        %1244 = vmatpush2.msra.mxu0 0.0
        %1245 = vmatprep.mubr.f32.mxu0 0.0
        %1246 = vmatmul.mubr.f32.gmra.mxu0 %v1120
        %v1247 = vpop.f32.mrf.mxu0
        %v1248 = vadd.f32 %v1164, %v1247
        %v1249 = vpop.f32.mrf.mxu0
        %v1250 = vadd.f32 %v1164, %v1249
        %1251 = vmatprep.mubr.f32.mxu0 0.0
        %1252 = vmatmul.mubr.f32.gmra.mxu0 %v1121
        %v1253 = vpop.f32.mrf.mxu0
        %v1254 = vadd.f32 %v1169, %v1253
        %v1255 = vpop.f32.mrf.mxu0
        %v1256 = vadd.f32 %v1169, %v1255
        %1257 = vmatprep.mubr.f32.mxu0 0.0
        %1258 = vmatmul.mubr.f32.gmra.mxu0 %v1122
        %v1259 = vpop.f32.mrf.mxu0
        %v1260 = vadd.f32 %v1174, %v1259
        %v1261 = vpop.f32.mrf.mxu0
        %v1262 = vadd.f32 %v1174, %v1261
        %1263 = vmatprep.mubr.f32.mxu0 0.0
        %1264 = vmatmul.mubr.f32.gmra.mxu0 %v1123
        %v1265 = vpop.f32.mrf.mxu0
        %v1266 = vadd.f32 %v1179, %v1265
        %v1267 = vpop.f32.mrf.mxu0
        %v1268 = vadd.f32 %v1179, %v1267
        %1269 = vdwg.mxu0
        %vm1270 = vcmp.gt.f32.partialorder %v1248, 0.0
        %vm1271 = vcmp.gt.f32.partialorder %v1250, 0.0
        %vm1272 = vcmp.gt.f32.partialorder %v1254, 0.0
        %vm1273 = vcmp.gt.f32.partialorder %v1256, 0.0
        %vm1274 = vcmp.gt.f32.partialorder %v1260, 0.0
        %vm1275 = vcmp.gt.f32.partialorder %v1262, 0.0
        %vm1276 = vcmp.gt.f32.partialorder %v1266, 0.0
        %vm1277 = vcmp.gt.f32.partialorder %v1268, 0.0
        %v1278 = vmul.f32 %v1248, 0.01
        %v1279 = vmul.f32 %v1250, 0.01
        %v1280 = vmul.f32 %v1254, 0.01
        %v1281 = vmul.f32 %v1256, 0.01
        %v1282 = vmul.f32 %v1260, 0.01
        %v1283 = vmul.f32 %v1262, 0.01
        %v1284 = vmul.f32 %v1266, 0.01
        %v1285 = vmul.f32 %v1268, 0.01
        %v1286 = vsel %vm1270, %v1248, %v1278
        %v1287 = vsel %vm1271, %v1250, %v1279
        %v1288 = vsel %vm1272, %v1254, %v1280
        %v1289 = vsel %vm1273, %v1256, %v1281
        %v1290 = vsel %vm1274, %v1260, %v1282
        %v1291 = vsel %vm1275, %v1262, %v1283
        %v1292 = vsel %vm1276, %v1266, %v1284
        %v1293 = vsel %vm1277, %v1268, %v1285
        %1294 = vst [vmem:[#allocation2] sm:$0xff] %v1286
        %1295 = vst [vmem:[#allocation2 + $0x8] sm:$0xff] %v1287
        %1296 = vst [vmem:[#allocation2 + $0x10] sm:$0xff] %v1288
        %1297 = vst [vmem:[#allocation2 + $0x18] sm:$0xff] %v1289
        %1298 = vst [vmem:[#allocation2 + $0x20] sm:$0xff] %v1290
        %1299 = vst [vmem:[#allocation2 + $0x28] sm:$0xff] %v1291
        %1300 = vst [vmem:[#allocation2 + $0x30] sm:$0xff] %v1292
        %1301 = vst [vmem:[#allocation2 + $0x38] sm:$0xff] %v1293
        %s1302 = scalar_lea.vmem %s1, 96
        %v1303 = vld [vmem:[%s1302] sm:$0xff]
        %v1304 = vld [vmem:[%s1302 + $0x8] sm:$0xff]
        %v1305 = vld [vmem:[%s1302 + $0x10] sm:$0xff]
        %v1306 = vld [vmem:[%s1302 + $0x18] sm:$0xff]
        %v1307 = vld [vmem:[#allocation2] sm:$0xff]
        %v1308 = vld [vmem:[#allocation2 + $0x8] sm:$0xff]
        %v1309 = vld [vmem:[#allocation2 + $0x10] sm:$0xff]
        %v1310 = vld [vmem:[#allocation2 + $0x18] sm:$0xff]
        %v1311 = vld [vmem:[#allocation2 + $0x20] sm:$0xff]
        %v1312 = vld [vmem:[#allocation2 + $0x28] sm:$0xff]
        %v1313 = vld [vmem:[#allocation2 + $0x30] sm:$0xff]
        %v1314 = vld [vmem:[#allocation2 + $0x38] sm:$0xff]
        %v1315 = vld [vmem:[#allocation2 + $0x40] sm:$0xff]
        %v1316 = vld [vmem:[#allocation2 + $0x48] sm:$0xff]
        %v1317 = vld [vmem:[#allocation2 + $0x50] sm:$0xff]
        %v1318 = vld [vmem:[#allocation2 + $0x58] sm:$0xff]
        %v1319 = vld [vmem:[#allocation2 + $0x60] sm:$0xff]
        %v1320 = vld [vmem:[#allocation2 + $0x68] sm:$0xff]
        %v1321 = vld [vmem:[#allocation2 + $0x70] sm:$0xff]
        %v1322 = vld [vmem:[#allocation2 + $0x78] sm:$0xff]
        %v1323 = vld [vmem:[#allocation2 + $0x80] sm:$0xff]
        %v1324 = vld [vmem:[#allocation2 + $0x88] sm:$0xff]
        %v1325 = vld [vmem:[#allocation2 + $0x90] sm:$0xff]
        %v1326 = vld [vmem:[#allocation2 + $0x98] sm:$0xff]
        %v1327 = vld [vmem:[#allocation2 + $0xa0] sm:$0xff]
        %v1328 = vld [vmem:[#allocation2 + $0xa8] sm:$0xff]
        %v1329 = vld [vmem:[#allocation2 + $0xb0] sm:$0xff]
        %v1330 = vld [vmem:[#allocation2 + $0xb8] sm:$0xff]
        %v1331 = vld [vmem:[#allocation2 + $0xc0] sm:$0xff]
        %v1332 = vld [vmem:[#allocation2 + $0xc8] sm:$0xff]
        %v1333 = vld [vmem:[#allocation2 + $0xd0] sm:$0xff]
        %v1334 = vld [vmem:[#allocation2 + $0xd8] sm:$0xff]
        %v1335 = vld [vmem:[#allocation2 + $0xe0] sm:$0xff]
        %v1336 = vld [vmem:[#allocation2 + $0xe8] sm:$0xff]
        %v1337 = vld [vmem:[#allocation2 + $0xf0] sm:$0xff]
        %v1338 = vld [vmem:[#allocation2 + $0xf8] sm:$0xff]
        %s1339 = scalar_lea.vmem %s2, 96
        %v1340 = vld [vmem:[%s1339] sm:$0xff]
        %v1341 = vld [vmem:[%s1339 + $0x8] sm:$0xff]
        %v1342 = vld [vmem:[%s1339 + $0x10] sm:$0xff]
        %v1343 = vld [vmem:[%s1339 + $0x18] sm:$0xff]
        %1345 = vset.pattern.permute.xlu0 0
        %1346 = vperm.xlu0 %1345, %v1340
        %v1347 = vpop.permute.xlu0 %1346
        %1350 = vset.pattern.permute.xlu0 0
        %1351 = vperm.xlu0 %1350, %v1341
        %v1352 = vpop.permute.xlu0 %1351
        %1355 = vset.pattern.permute.xlu0 0
        %1356 = vperm.xlu0 %1355, %v1342
        %v1357 = vpop.permute.xlu0 %1356
        %1360 = vset.pattern.permute.xlu0 0
        %1361 = vperm.xlu0 %1360, %v1343
        %v1362 = vpop.permute.xlu0 %1361
        %1364 = vmatprep.subr.mxu0 %v1338
        %1365 = vmatpush1.msra.mxu0 %v1337
        %1366 = vmatprep.subr.mxu0 %v1336
        %1367 = vmatpush1.msra.mxu0 %v1335
        %1368 = vmatprep.subr.mxu0 %v1334
        %1369 = vmatpush1.msra.mxu0 %v1333
        %1370 = vmatprep.subr.mxu0 %v1332
        %1371 = vmatpush1.msra.mxu0 %v1331
        %1372 = vmatprep.subr.mxu0 %v1330
        %1373 = vmatpush1.msra.mxu0 %v1329
        %1374 = vmatprep.subr.mxu0 %v1328
        %1375 = vmatpush1.msra.mxu0 %v1327
        %1376 = vmatprep.subr.mxu0 %v1326
        %1377 = vmatpush1.msra.mxu0 %v1325
        %1378 = vmatprep.subr.mxu0 %v1324
        %1379 = vmatpush1.msra.mxu0 %v1323
        %1380 = vmatprep.subr.mxu0 %v1322
        %1381 = vmatpush1.msra.mxu0 %v1321
        %1382 = vmatprep.subr.mxu0 %v1320
        %1383 = vmatpush1.msra.mxu0 %v1319
        %1384 = vmatprep.subr.mxu0 %v1318
        %1385 = vmatpush1.msra.mxu0 %v1317
        %1386 = vmatprep.subr.mxu0 %v1316
        %1387 = vmatpush1.msra.mxu0 %v1315
        %1388 = vmatprep.subr.mxu0 %v1314
        %1389 = vmatpush1.msra.mxu0 %v1313
        %1390 = vmatprep.subr.mxu0 %v1312
        %1391 = vmatpush1.msra.mxu0 %v1311
        %1392 = vmatprep.subr.mxu0 %v1310
        %1393 = vmatpush1.msra.mxu0 %v1309
        %1394 = vmatprep.subr.mxu0 %v1308
        %1395 = vmatpush1.msra.mxu0 %v1307
        %1396 = vmatprep.subr.mxu0 0.0
        %1397 = vmatpush2.msra.mxu0 0.0
        %1398 = vmatprep.subr.mxu0 0.0
        %1399 = vmatpush2.msra.mxu0 0.0
        %1400 = vmatprep.subr.mxu0 0.0
        %1401 = vmatpush2.msra.mxu0 0.0
        %1402 = vmatprep.subr.mxu0 0.0
        %1403 = vmatpush2.msra.mxu0 0.0
        %1404 = vmatprep.subr.mxu0 0.0
        %1405 = vmatpush2.msra.mxu0 0.0
        %1406 = vmatprep.subr.mxu0 0.0
        %1407 = vmatpush2.msra.mxu0 0.0
        %1408 = vmatprep.subr.mxu0 0.0
        %1409 = vmatpush2.msra.mxu0 0.0
        %1410 = vmatprep.subr.mxu0 0.0
        %1411 = vmatpush2.msra.mxu0 0.0
        %1412 = vmatprep.subr.mxu0 0.0
        %1413 = vmatpush2.msra.mxu0 0.0
        %1414 = vmatprep.subr.mxu0 0.0
        %1415 = vmatpush2.msra.mxu0 0.0
        %1416 = vmatprep.subr.mxu0 0.0
        %1417 = vmatpush2.msra.mxu0 0.0
        %1418 = vmatprep.subr.mxu0 0.0
        %1419 = vmatpush2.msra.mxu0 0.0
        %1420 = vmatprep.subr.mxu0 0.0
        %1421 = vmatpush2.msra.mxu0 0.0
        %1422 = vmatprep.subr.mxu0 0.0
        %1423 = vmatpush2.msra.mxu0 0.0
        %1424 = vmatprep.subr.mxu0 0.0
        %1425 = vmatpush2.msra.mxu0 0.0
        %1426 = vmatprep.subr.mxu0 0.0
        %1427 = vmatpush2.msra.mxu0 0.0
        %1428 = vmatprep.mubr.f32.mxu0 0.0
        %1429 = vmatmul.mubr.f32.gmra.mxu0 %v1303
        %v1430 = vpop.f32.mrf.mxu0
        %v1431 = vadd.f32 %v1347, %v1430
        %v1432 = vpop.f32.mrf.mxu0
        %v1433 = vadd.f32 %v1347, %v1432
        %1434 = vmatprep.mubr.f32.mxu0 0.0
        %1435 = vmatmul.mubr.f32.gmra.mxu0 %v1304
        %v1436 = vpop.f32.mrf.mxu0
        %v1437 = vadd.f32 %v1352, %v1436
        %v1438 = vpop.f32.mrf.mxu0
        %v1439 = vadd.f32 %v1352, %v1438
        %1440 = vmatprep.mubr.f32.mxu0 0.0
        %1441 = vmatmul.mubr.f32.gmra.mxu0 %v1305
        %v1442 = vpop.f32.mrf.mxu0
        %v1443 = vadd.f32 %v1357, %v1442
        %v1444 = vpop.f32.mrf.mxu0
        %v1445 = vadd.f32 %v1357, %v1444
        %1446 = vmatprep.mubr.f32.mxu0 0.0
        %1447 = vmatmul.mubr.f32.gmra.mxu0 %v1306
        %v1448 = vpop.f32.mrf.mxu0
        %v1449 = vadd.f32 %v1362, %v1448
        %v1450 = vpop.f32.mrf.mxu0
        %v1451 = vadd.f32 %v1362, %v1450
        %1452 = vdwg.mxu0
        %vm1453 = vcmp.gt.f32.partialorder %v1431, 0.0
        %vm1454 = vcmp.gt.f32.partialorder %v1433, 0.0
        %vm1455 = vcmp.gt.f32.partialorder %v1437, 0.0
        %vm1456 = vcmp.gt.f32.partialorder %v1439, 0.0
        %vm1457 = vcmp.gt.f32.partialorder %v1443, 0.0
        %vm1458 = vcmp.gt.f32.partialorder %v1445, 0.0
        %vm1459 = vcmp.gt.f32.partialorder %v1449, 0.0
        %vm1460 = vcmp.gt.f32.partialorder %v1451, 0.0
        %v1461 = vmul.f32 %v1431, 0.01
        %v1462 = vmul.f32 %v1433, 0.01
        %v1463 = vmul.f32 %v1437, 0.01
        %v1464 = vmul.f32 %v1439, 0.01
        %v1465 = vmul.f32 %v1443, 0.01
        %v1466 = vmul.f32 %v1445, 0.01
        %v1467 = vmul.f32 %v1449, 0.01
        %v1468 = vmul.f32 %v1451, 0.01
        %v1469 = vsel %vm1453, %v1431, %v1461
        %v1470 = vsel %vm1454, %v1433, %v1462
        %v1471 = vsel %vm1455, %v1437, %v1463
        %v1472 = vsel %vm1456, %v1439, %v1464
        %v1473 = vsel %vm1457, %v1443, %v1465
        %v1474 = vsel %vm1458, %v1445, %v1466
        %v1475 = vsel %vm1459, %v1449, %v1467
        %v1476 = vsel %vm1460, %v1451, %v1468
        %1477 = vst [vmem:[#allocation2 + $0x40] sm:$0xff] %v1469
        %1478 = vst [vmem:[#allocation2 + $0x48] sm:$0xff] %v1470
        %1479 = vst [vmem:[#allocation2 + $0x50] sm:$0xff] %v1471
        %1480 = vst [vmem:[#allocation2 + $0x58] sm:$0xff] %v1472
        %1481 = vst [vmem:[#allocation2 + $0x60] sm:$0xff] %v1473
        %1482 = vst [vmem:[#allocation2 + $0x68] sm:$0xff] %v1474
        %1483 = vst [vmem:[#allocation2 + $0x70] sm:$0xff] %v1475
        %1484 = vst [vmem:[#allocation2 + $0x78] sm:$0xff] %v1476
        %v1485 = vld [vmem:[#allocation4] sm:$0xff]
        %v1486 = vld [vmem:[#allocation2] sm:$0xff]
        %v1487 = vld [vmem:[#allocation2 + $0x8] sm:$0xff]
        %v1488 = vld [vmem:[#allocation2 + $0x10] sm:$0xff]
        %v1489 = vld [vmem:[#allocation2 + $0x18] sm:$0xff]
        %v1490 = vld [vmem:[#allocation2 + $0x20] sm:$0xff]
        %v1491 = vld [vmem:[#allocation2 + $0x28] sm:$0xff]
        %v1492 = vld [vmem:[#allocation2 + $0x30] sm:$0xff]
        %v1493 = vld [vmem:[#allocation2 + $0x38] sm:$0xff]
        %v1494 = vld [vmem:[#allocation2 + $0x40] sm:$0xff]
        %v1495 = vld [vmem:[#allocation2 + $0x48] sm:$0xff]
        %v1496 = vld [vmem:[#allocation2 + $0x50] sm:$0xff]
        %v1497 = vld [vmem:[#allocation2 + $0x58] sm:$0xff]
        %v1498 = vld [vmem:[#allocation2 + $0x60] sm:$0xff]
        %v1499 = vld [vmem:[#allocation2 + $0x68] sm:$0xff]
        %v1500 = vld [vmem:[#allocation2 + $0x70] sm:$0xff]
        %v1501 = vld [vmem:[#allocation2 + $0x78] sm:$0xff]
        %v1502 = vld [vmem:[#allocation2 + $0x80] sm:$0xff]
        %v1503 = vld [vmem:[#allocation2 + $0x88] sm:$0xff]
        %v1504 = vld [vmem:[#allocation2 + $0x90] sm:$0xff]
        %v1505 = vld [vmem:[#allocation2 + $0x98] sm:$0xff]
        %v1506 = vld [vmem:[#allocation2 + $0xa0] sm:$0xff]
        %v1507 = vld [vmem:[#allocation2 + $0xa8] sm:$0xff]
        %v1508 = vld [vmem:[#allocation2 + $0xb0] sm:$0xff]
        %v1509 = vld [vmem:[#allocation2 + $0xb8] sm:$0xff]
        %v1510 = vld [vmem:[#allocation2 + $0xc0] sm:$0xff]
        %v1511 = vld [vmem:[#allocation2 + $0xc8] sm:$0xff]
        %v1512 = vld [vmem:[#allocation2 + $0xd0] sm:$0xff]
        %v1513 = vld [vmem:[#allocation2 + $0xd8] sm:$0xff]
        %v1514 = vld [vmem:[#allocation2 + $0xe0] sm:$0xff]
        %v1515 = vld [vmem:[#allocation2 + $0xe8] sm:$0xff]
        %v1516 = vld [vmem:[#allocation2 + $0xf0] sm:$0xff]
        %v1517 = vld [vmem:[#allocation2 + $0xf8] sm:$0xff]
        %1518 = vmatprep.subr.mxu0 %v1517
        %1519 = vmatpush1.msra.mxu0 %v1516
        %1520 = vmatprep.subr.mxu0 %v1515
        %1521 = vmatpush1.msra.mxu0 %v1514
        %1522 = vmatprep.subr.mxu0 %v1513
        %1523 = vmatpush1.msra.mxu0 %v1512
        %1524 = vmatprep.subr.mxu0 %v1511
        %1525 = vmatpush1.msra.mxu0 %v1510
        %1526 = vmatprep.subr.mxu0 %v1509
        %1527 = vmatpush1.msra.mxu0 %v1508
        %1528 = vmatprep.subr.mxu0 %v1507
        %1529 = vmatpush1.msra.mxu0 %v1506
        %1530 = vmatprep.subr.mxu0 %v1505
        %1531 = vmatpush1.msra.mxu0 %v1504
        %1532 = vmatprep.subr.mxu0 %v1503
        %1533 = vmatpush1.msra.mxu0 %v1502
        %1534 = vmatprep.subr.mxu0 %v1501
        %1535 = vmatpush1.msra.mxu0 %v1500
        %1536 = vmatprep.subr.mxu0 %v1499
        %1537 = vmatpush1.msra.mxu0 %v1498
        %1538 = vmatprep.subr.mxu0 %v1497
        %1539 = vmatpush1.msra.mxu0 %v1496
        %1540 = vmatprep.subr.mxu0 %v1495
        %1541 = vmatpush1.msra.mxu0 %v1494
        %1542 = vmatprep.subr.mxu0 %v1493
        %1543 = vmatpush1.msra.mxu0 %v1492
        %1544 = vmatprep.subr.mxu0 %v1491
        %1545 = vmatpush1.msra.mxu0 %v1490
        %1546 = vmatprep.subr.mxu0 %v1489
        %1547 = vmatpush1.msra.mxu0 %v1488
        %1548 = vmatprep.subr.mxu0 %v1487
        %1549 = vmatpush1.msra.mxu0 %v1486
        %1550 = vmatprep.subr.mxu0 0.0
        %1551 = vmatpush2.msra.mxu0 0.0
        %1552 = vmatprep.subr.mxu0 0.0
        %1553 = vmatpush2.msra.mxu0 0.0
        %1554 = vmatprep.subr.mxu0 0.0
        %1555 = vmatpush2.msra.mxu0 0.0
        %1556 = vmatprep.subr.mxu0 0.0
        %1557 = vmatpush2.msra.mxu0 0.0
        %1558 = vmatprep.subr.mxu0 0.0
        %1559 = vmatpush2.msra.mxu0 0.0
        %1560 = vmatprep.subr.mxu0 0.0
        %1561 = vmatpush2.msra.mxu0 0.0
        %1562 = vmatprep.subr.mxu0 0.0
        %1563 = vmatpush2.msra.mxu0 0.0
        %1564 = vmatprep.subr.mxu0 0.0
        %1565 = vmatpush2.msra.mxu0 0.0
        %1566 = vmatprep.subr.mxu0 0.0
        %1567 = vmatpush2.msra.mxu0 0.0
        %1568 = vmatprep.subr.mxu0 0.0
        %1569 = vmatpush2.msra.mxu0 0.0
        %1570 = vmatprep.subr.mxu0 0.0
        %1571 = vmatpush2.msra.mxu0 0.0
        %1572 = vmatprep.subr.mxu0 0.0
        %1573 = vmatpush2.msra.mxu0 0.0
        %1574 = vmatprep.subr.mxu0 0.0
        %1575 = vmatpush2.msra.mxu0 0.0
        %1576 = vmatprep.subr.mxu0 0.0
        %1577 = vmatpush2.msra.mxu0 0.0
        %1578 = vmatprep.subr.mxu0 0.0
        %1579 = vmatpush2.msra.mxu0 0.0
        %1580 = vmatprep.subr.mxu0 0.0
        %1581 = vmatpush2.msra.mxu0 0.0
        %1582 = vmatprep.mubr.f32.mxu0 0.0
        %1583 = vmatmul.mubr.f32.gmra.mxu0 %v1485
        %v1584 = vpop.f32.mrf.mxu0
        %v1585 = vadd.f32 0.0, %v1584
        %v1586 = vpop.f32.mrf.mxu0
        %v1587 = vadd.f32 0.0, %v1586
        %1588 = vdwg.mxu0
        %v1589 = vld [vmem:[#allocation3] sm:$0x1]
        %1591 = vset.pattern.permute.xlu0 0
        %1592 = vperm.xlu0 %1591, %v1589
        %v1593 = vpop.permute.xlu0 %1592
        %v1595 = vlaneseq
        %v1596 = vshrl.u32 %v1595, 7
        %v1597 = vsub.s32 0, %v1596
        %v1598 = vrot.slane %v1593, %v1597
        %v1599 = vadd.f32 %v1585, %v1598
        %v1600 = vadd.f32 %v1587, %v1598
        %v1601 = vtanh.pop %v1599
        %v1602 = vtanh.pop %v1600
        %v1603 = vadd.f32 %v1601, 1.0
        %v1604 = vadd.f32 %v1602, 1.0
        %v1605 = vmul.f32 %v1603, 0.5
        %v1606 = vmul.f32 %v1604, 0.5
        %v1609 = vcombine.low %v1605, %v1606
        %v1611 = vunpack.c.l.s4 1966171168
        %v1612 = vunpack.c.0.s8 %v1611
        %v1613 = vlaneseq
        %v1614 = vshrl.u32 %v1613, 7
        %v1615 = vsub.s32 %v1612, %v1614
        %v1616 = vrot.slane %v1609, %v1615
        %v1618 = vunpack.c.l.s4 1966171168
        %v1619 = vunpack.c.0.s8 %v1618
        %v1620 = vlaneseq
        %v1621 = vshrl.u32 %v1620, 7
        %v1622 = vsub.s32 %v1619, %v1621
        %v1623 = vrot.slane %v1616, %v1622
        %v1625 = vlaneseq
        %vm1626 = vcmp.ge.s32.totalorder %v1625, 0
        %vm1627 = vcmp.lt.s32.totalorder %v1625, 256
        %vm1628 = vmand %vm1626, %vm1627
        %1629 = vst.msk [vmem:[%s233] sm:$0x3] %vm1628, %v1623
        %s1630 = sand.u32 %s140, 1
        %s1631 = scalar_lea.sflag [#allocation6], %s1630
        %s1632 = sand.u32 %s140, 1
        %s1633 = smul.addr %s1632, 2
        %s1634 = scalar_lea.vmem [#allocation7], %s1633
        // Predicated region
        $region45: #{fourier_forward.1} parent=39 // pred_check
          %p1635 = pneg %p150
        $region46: #{fourier_forward.1} parent=39 // pred_check_branch
          %1637 = sbr.rel (%p1635) target = $region48
        $region47: #{fourier_forward.1} parent=39 // pred_region
          %s1638 = smul.u32 2, %s22
          %s1640 = ssub.s32 32, 32
          %1641 = vsyncadd %s1631, %s1640
          %s1642 = smul.addr %s1638, 16
          %s1643 = scalar_lea.hbm %s5, %s1642
          %s1645 = sshll.u32 %s1634, 4
          %s1646 = int_to_ptr.vmem [resolvable:$true] %s1645
          %1648 = dma.vmem_to_hbm [thread:$0]  %s1646, 32, %s1643, %s1631
        $region48: #{fourier_forward.1} parent=39 // pred_fallthru
          _
      $region40: #{fourier_forward.1} parent=5 // pred_fallthru
        _
      %p1649 = scmp.le.s32.totalorder 2, %s17
      // Predicated region
      $region49: #{fourier_forward.1} parent=5 // pred_check
        %p1650 = pneg %p1649
      $region50: #{fourier_forward.1} parent=5 // pred_check_branch
        %1652 = sbr.rel (%p1650) target = $region52
      $region51: #{fourier_forward.1} parent=5 // pred_region
        %s1653 = ssub.s32 %s17, 2
        // Predicated region
        $region53: #{fourier_forward.1} parent=51 // pred_check
          %p1654 = pneg %p156
        $region54: #{fourier_forward.1} parent=51 // pred_check_branch
          %1656 = sbr.rel (%p1654) target = $region56
        $region55: #{fourier_forward.1} parent=51 // pred_region
          %s1657 = sand.u32 %s141, 1
          %s1658 = scalar_lea.sflag [#allocation6], %s1657
          %s1659 = sand.u32 %s141, 1
          %s1660 = smul.addr %s1659, 2
          %s1661 = scalar_lea.vmem [#allocation7], %s1660
          %1662 = dma.done %s1658, 32
        $region56: #{fourier_forward.1} parent=51 // pred_fallthru
          _
      $region52: #{fourier_forward.1} parent=5 // pred_fallthru
        _
    $region6: #{fourier_forward.1} parent=1 // loop_footer
      %s21 = sadd.s32 1, %s17
    $region7: #{fourier_forward.1} parent=1 // loop_footer_branch
      %16 = sbr.rel target = $region3
    $region8: #{fourier_forward.1} parent=1 // loop_exit
      _
    %1663 = vsyncpa [#allocation5], 1
    %s1664 = scalar_lea.sflag [#allocation5], 1
    %1665 = vsyncpa %s1664, 1
    %1666 = vsyncpa [#allocation6], 1
    %s1667 = scalar_lea.sflag [#allocation6], 1
    %1668 = vsyncpa %s1667, 1

</llo_original>
